<compile_context>
chip_gen: v6e
topology: v6e:2x2x1
jax: 0.10.0
libtpu: 0.0.40
codegen_flags: <defaults>
</compile_context>

<pallas_src>
import functools

import jax
import jax.numpy as jnp
import numpy as np
from jax.experimental import pallas as pl
from jax.experimental.pallas import tpu as pltpu

LEAKY_SLOPE = 0.2
BN_EPS = 1e-5
K = 4        # conv kernel size
STRIDE = 2
PAD = 1

# explicit scoped-VMEM budget: above v5e's 16 MiB default, well under v7x's
# 64 MiB physical.
VMEM_LIMIT = 32 * 1024 * 1024


def _round_up(a, b):
    return (a + b - 1) // b * b


def _tile_rows(n_rows, block_rows, mult):
    """Pick a row tile (multiple of `mult`) and the padded row count."""
    t = min(block_rows, _round_up(n_rows, mult))
    t = max(mult, _round_up(t, mult))
    return t, _round_up(n_rows, t)


# --------------------------- Pallas kernels ---------------------------------

def _down_kernel(p_ref, w_ref, h_ref):
    """LeakyReLU(0.2) -> Conv2d(k4,s2,p1) as matmul -> ReLU, one row tile.

    p_ref: (T, K*K*Cin) bf16 im2col patches of the zero-padded input.
           (LeakyReLU(0)=0 commutes with zero padding, so it is fused here.)
    w_ref: (K*K*Cin, Cmid) bf16 reshaped Conv2d weight (resident across tiles).
    h_ref: (T, Cmid) bf16 hidden activations (start of the "up" path).
    """
    p = p_ref[...].astype(jnp.float32)
    lp = jnp.where(p >= 0.0, p, LEAKY_SLOPE * p).astype(jnp.bfloat16)
    d = jnp.dot(lp, w_ref[...], preferred_element_type=jnp.float32)
    h_ref[...] = jnp.maximum(d, 0.0).astype(h_ref.dtype)


def _up_phase_kernel(pu_ref, w_ref, u_ref, stats_ref, *, kdim):
    """Sub-pixel decomposed ConvTranspose2d(k4,s2,p1) + partial BN statistics.

    pu_ref:    (T, 4*kdim) bf16, columns = 4 output phases x (4 taps * Cmid),
               dense (no zero taps).
    w_ref:     (4, kdim, Cout) bf16 per-phase weights (resident).
    u_ref:     (T, 4*Cout) f32 raw deconv output, phases along lanes.
    stats_ref: (1, 2, 4*Cout) f32 per-tile [col_sum, col_sum_sq]; reduced in the
               wrapper so the grid axis stays "parallel" (megacore / 2-TC v7x).
    """
    phases = []
    for p in range(4):                      # static unroll: 4 dense MXU matmuls
        taps = pu_ref[:, p * kdim:(p + 1) * kdim]
        phases.append(jnp.dot(taps, w_ref[p],
                              preferred_element_type=jnp.float32))
    u = jnp.concatenate(phases, axis=-1)    # (T, 4*Cout) f32
    u_ref[...] = u
    s = jnp.sum(u, axis=0, keepdims=True)
    ss = jnp.sum(u * u, axis=0, keepdims=True)
    stats_ref[...] = jnp.concatenate([s, ss], axis=0)[None]


def _bn_apply_kernel(u_ref, scale_ref, shift_ref, y_ref):
    """y = u * scale + shift with precomputed per-lane scale/shift (lane-dense)."""
    y_ref[...] = u_ref[...] * scale_ref[...] + shift_ref[...]


# --------------------------- wrapper (glue) ----------------------------------

def unet_innermost_block(x_nchw, wd, wu, gamma, beta, *, block_rows=256):
    """x_nchw: (N, Cin, H, W) f32
       wd:     (Cmid, Cin, 4, 4)  torch Conv2d weight (OIHW)
       wu:     (Cmid, Cout, 4, 4) torch ConvTranspose2d weight (IOHW)
       gamma, beta: (Cout,)       BatchNorm2d affine params
       returns (N, Cin + Cout, H, W) f32"""
    N, Cin, H, W = x_nchw.shape
    Cmid = wd.shape[0]
    Cout = wu.shape[1]
    Hh, Wh = H // STRIDE, W // STRIDE
    R = N * Hh * Wh                       # one row per (n, oh, ow) of the down conv

    x_f32 = x_nchw.astype(jnp.float32)
    xb = jnp.transpose(x_f32, (0, 2, 3, 1)).astype(jnp.bfloat16)   # NHWC bf16

    # ---- down path: im2col (wrapper glue) + fused act/conv/act kernel ----
    # TODO(synk): the (R, 16*Cin) im2col matrix is still materialized in HBM;
    # removing it needs in-kernel patch extraction from haloed (overlapping) blocks.
    xp = jnp.pad(xb, ((0, 0), (PAD, PAD), (PAD, PAD), (0, 0)))
    taps = [xp[:, kh:kh + STRIDE * Hh:STRIDE, kw:kw + STRIDE * Wh:STRIDE, :]
            for kh in range(K) for kw in range(K)]
    pd = jnp.concatenate(taps, axis=-1).reshape(R, K * K * Cin)
    wd_eq = jnp.transpose(wd, (2, 3, 1, 0)).reshape(K * K * Cin, Cmid)
    wd_eq = wd_eq.astype(jnp.bfloat16)

    trd, Rd = _tile_rows(R, block_rows, 16)        # 16: bf16 sublane packing
    pd = jnp.pad(pd, ((0, Rd - R), (0, 0)))

    h_flat = pl.pallas_call(
        _down_kernel,
        grid=(Rd // trd,),
        in_specs=[pl.BlockSpec((trd, K * K * Cin), lambda i: (i, 0)),
                  pl.BlockSpec((K * K * Cin, Cmid), lambda i: (0, 0))],
        out_specs=pl.BlockSpec((trd, Cmid), lambda i: (i, 0)),
        out_shape=jax.ShapeDtypeStruct((Rd, Cmid), jnp.bfloat16),
        compiler_params=pltpu.CompilerParams(
            dimension_semantics=("parallel",),
            vmem_limit_bytes=VMEM_LIMIT),
    )(pd, wd_eq)
    h = h_flat[:R].reshape(N, Hh, Wh, Cmid)

    # ---- up path: sub-pixel (phase) decomposition of the transposed conv ----
    # y[n, 2i+ph, 2j+pw, :] = sum_t  h[n, i+dh_t, j+dw_t, :] @ Wu[:, :, kh_t, kw_t]
    # Only the 4 non-zero taps per output phase are gathered (vs 16 mostly-zero).
    hp = jnp.pad(h, ((0, 0), (1, 1), (1, 1), (0, 0)))

    def shifted(dh, dw):
        return hp[:, 1 + dh:1 + dh + Hh, 1 + dw:1 + dw + Wh, :]

    PHASE_TAPS = [   # (dh, dw, kh, kw) for output phases (0,0),(0,1),(1,0),(1,1)
        [(0, 0, 1, 1), (0, -1, 1, 3), (-1, 0, 3, 1), (-1, -1, 3, 3)],
        [(0, 1, 1, 0), (0, 0, 1, 2), (-1, 1, 3, 0), (-1, 0, 3, 2)],
        [(1, 0, 0, 1), (1, -1, 0, 3), (0, 0, 2, 1), (0, -1, 2, 3)],
        [(1, 1, 0, 0), (1, 0, 0, 2), (0, 1, 2, 0), (0, 0, 2, 2)],
    ]
    pu_cols, wu_stack = [], []
    for phase in PHASE_TAPS:
        w_taps = []
        for (dh, dw, kh, kw) in phase:
            pu_cols.append(shifted(dh, dw))
            w_taps.append(wu[:, :, kh, kw])                 # (Cmid, Cout)
        wu_stack.append(jnp.concatenate(w_taps, axis=0))    # (4*Cmid, Cout)
    kdim = K * Cmid                                         # 4*Cmid taps per phase
    pu = jnp.concatenate(pu_cols, axis=-1).reshape(R, 4 * kdim)
    wu_ph = jnp.stack(wu_stack, axis=0).astype(jnp.bfloat16)   # (4, kdim, Cout)

    c4 = 4 * Cout
    tru, Ru = _tile_rows(R, block_rows, 16)
    pu = jnp.pad(pu, ((0, Ru - R), (0, 0)))                 # zero rows -> zero stats
    gu = Ru // tru

    u_flat, stats = pl.pallas_call(
        functools.partial(_up_phase_kernel, kdim=kdim),
        grid=(gu,),
        in_specs=[pl.BlockSpec((tru, 4 * kdim), lambda i: (i, 0)),
                  pl.BlockSpec((4, kdim, Cout), lambda i: (0, 0, 0))],
        out_specs=(pl.BlockSpec((tru, c4), lambda i: (i, 0)),
                   pl.BlockSpec((1, 2, c4), lambda i: (i, 0, 0))),
        out_shape=(jax.ShapeDtypeStruct((Ru, c4), jnp.float32),
                   jax.ShapeDtypeStruct((gu, 2, c4), jnp.float32)),
        compiler_params=pltpu.CompilerParams(
            dimension_semantics=("parallel",),
            vmem_limit_bytes=VMEM_LIMIT),
    )(pu, wu_ph)

    # ---- global BatchNorm stats (batch statistics) + scale/shift precompute ----
    totals = jnp.sum(stats, axis=0)                         # (2, 4*Cout)
    count = jnp.float32(N * H * W)                          # elements per channel
    mean = jnp.sum(totals[0].reshape(4, Cout), axis=0) / count
    e2 = jnp.sum(totals[1].reshape(4, Cout), axis=0) / count
    var = jnp.maximum(e2 - mean * mean, 0.0)
    inv = jax.lax.rsqrt(var + BN_EPS)
    scale = gamma.astype(jnp.float32) * inv                 # (Cout,)
    shift = beta.astype(jnp.float32) - mean * scale         # (Cout,)

    # ---- normalization pass: fold rows so the stored lane width is 128 ----
    u = u_flat[:R]                                          # (R, 4*Cout) f32
    group = 128 // c4 if (c4 < 128 and 128 % c4 == 0) else 1
    width3 = group * c4
    rf_raw = (R + group - 1) // group
    tr3, Rf = _tile_rows(rf_raw, block_rows, 8)
    R3 = Rf * group
    u3 = jnp.pad(u, ((0, R3 - R), (0, 0))).reshape(Rf, width3)
    sc3 = jnp.tile(jnp.tile(scale, 4), group).reshape(1, width3)
    sh3 = jnp.tile(jnp.tile(shift, 4), group).reshape(1, width3)

    y3 = pl.pallas_call(
        _bn_apply_kernel,
        grid=(Rf // tr3,),
        in_specs=[pl.BlockSpec((tr3, width3), lambda i: (i, 0)),
                  pl.BlockSpec((1, width3), lambda i: (0, 0)),
                  pl.BlockSpec((1, width3), lambda i: (0, 0))],
        out_specs=pl.BlockSpec((tr3, width3), lambda i: (i, 0)),
        out_shape=jax.ShapeDtypeStruct((Rf, width3), jnp.float32),
        compiler_params=pltpu.CompilerParams(
            dimension_semantics=("parallel",),
            vmem_limit_bytes=VMEM_LIMIT),
    )(u3, sc3, sh3)

    # ---- un-phase (pure layout plumbing) + skip concat in the wrapper ----
    bn = y3.reshape(R3, c4)[:R].reshape(N, Hh, Wh, 2, 2, Cout)
    y = jnp.transpose(bn, (0, 1, 3, 2, 4, 5)).reshape(N, H, W, Cout)
    y_nchw = jnp.transpose(y, (0, 3, 1, 2))
    return jnp.concatenate([x_f32, y_nchw], axis=1)         # torch.cat([x, y], 1)


# --------------------------- pure-JAX reference ------------------------------

def _ref_forward(x, wd, wu, gamma, beta):
    lx = jnp.where(x >= 0, x, LEAKY_SLOPE * x)
    d = jax.lax.conv_general_dilated(
        lx, wd, (STRIDE, STRIDE), ((PAD, PAD), (PAD, PAD)),
        dimension_numbers=('NCHW', 'OIHW', 'NCHW'))
    r = jnp.maximum(d, 0.0)
    w_eq = jnp.transpose(jnp.flip(wu, axis=(2, 3)), (1, 0, 2, 3))  # (O, I, kh, kw)
    pp = K - 1 - PAD
    u = jax.lax.conv_general_dilated(
        r, w_eq, (1, 1), ((pp, pp), (pp, pp)), lhs_dilation=(STRIDE, STRIDE),
        dimension_numbers=('NCHW', 'OIHW', 'NCHW'))
    mean = jnp.mean(u, axis=(0, 2, 3), keepdims=True)
    var = jnp.mean((u - mean) ** 2, axis=(0, 2, 3), keepdims=True)
    bn = (gamma[None, :, None, None] * (u - mean) * jax.lax.rsqrt(var + BN_EPS)
          + beta[None, :, None, None])
    return jnp.concatenate([x, bn], axis=1)


# --------------------------- main ---------------------------------------------

if __name__ == "__main__":
    key = jax.random.PRNGKey(0)
    k1, k2, k3, k4, k5 = jax.random.split(key, 5)

    N, outer_nc, inner_nc, H, W = 2, 4, 8, 16, 16
    input_nc = outer_nc          # innermost block: input_nc=None -> outer_nc

    x = jax.random.normal(k1, (N, input_nc, H, W), jnp.float32)
    wd = 0.1 * jax.random.normal(k2, (inner_nc, input_nc, K, K), jnp.float32)
    wu = 0.1 * jax.random.normal(k3, (inner_nc, outer_nc, K, K), jnp.float32)
    gamma = 1.0 + 0.1 * jax.random.normal(k4, (outer_nc,), jnp.float32)
    beta = 0.1 * jax.random.normal(k5, (outer_nc,), jnp.float32)

    # block_rows=48 at this toy size exercises multi-tile grids + row padding
    # (and the cross-tile BN-statistics reduction path).
    fwd = jax.jit(functools.partial(unet_innermost_block, block_rows=48))
    out = jax.block_until_ready(fwd(x, wd, wu, gamma, beta))

    ref = _ref_forward(x, wd, wu, gamma, beta)
    np.testing.assert_allclose(np.asarray(out), np.asarray(ref),
                               rtol=2e-2, atol=2e-2)
    print("KERNEL_OK")
</pallas_src>

<mosaic_0001>
module attributes {stable_mosaic.version = 11 : i64} {
  func.func @_down_kernel(%arg0: i32, %arg1: memref<48x64xbf16, #tpu.memory_space<vmem>>, %arg2: memref<64x8xbf16, #tpu.memory_space<vmem>>, %arg3: memref<48x8xbf16, #tpu.memory_space<vmem>>) attributes {dimension_semantics = [#tpu.dimension_semantics<parallel>], iteration_bounds = array<i64: 3>, scalar_prefetch = 0 : i64, scratch_operands = 0 : i64, tpu.core_type = #tpu.core_type<tc>, window_params = [{transform_indices = @transform_0, window_bounds = array<i64: 48, 64>}, {pipeline_mode = #tpu.pipeline_mode<synchronous>, transform_indices = @transform_1, window_bounds = array<i64: 64, 8>}, {transform_indices = @transform_2, window_bounds = array<i64: 48, 8>}]} {
    %c0 = arith.constant 0 : index
    %c0_0 = arith.constant 0 : index
    %0 = vector.load %arg1[%c0, %c0_0] : memref<48x64xbf16, #tpu.memory_space<vmem>>, vector<48x64xbf16>
    %1 = arith.extf %0 : vector<48x64xbf16> to vector<48x64xf32>
    %cst = arith.constant 0.000000e+00 : f32
    %2 = vector.broadcast %cst : f32 to vector<48x64xf32>
    %3 = arith.cmpf oge, %1, %2 : vector<48x64xf32>
    %cst_1 = arith.constant 2.000000e-01 : f32
    %4 = vector.broadcast %cst_1 : f32 to vector<48x64xf32>
    %5 = arith.mulf %4, %1 : vector<48x64xf32>
    %6 = arith.select %3, %1, %5 : vector<48x64xi1>, vector<48x64xf32>
    %7 = arith.truncf %6 : vector<48x64xf32> to vector<48x64xbf16>
    %c0_2 = arith.constant 0 : index
    %c0_3 = arith.constant 0 : index
    %8 = vector.load %arg2[%c0_2, %c0_3] : memref<64x8xbf16, #tpu.memory_space<vmem>>, vector<64x8xbf16>
    %cst_4 = arith.constant dense<0.000000e+00> : vector<48x8xf32>
    %9 = tpu.matmul %7, %8, %cst_4 {dimension_numbers = #tpu.dot_dimension_numbers<[1], [0], [0], [1], [0, 0, 1, 1], [], []>} : vector<48x64xbf16>, vector<64x8xbf16>, vector<48x8xf32> -> vector<48x8xf32>
    %cst_5 = arith.constant 0.000000e+00 : f32
    %10 = vector.broadcast %cst_5 : f32 to vector<48x8xf32>
    %11 = arith.maximumf %9, %10 : vector<48x8xf32>
    %12 = arith.truncf %11 : vector<48x8xf32> to vector<48x8xbf16>
    %c0_6 = arith.constant 0 : index
    %c0_7 = arith.constant 0 : index
    %13 = vector.load %arg3[%c0_6, %c0_7] : memref<48x8xbf16, #tpu.memory_space<vmem>>, vector<48x8xbf16>
    tpu.vector_store %arg3[%c0_6, %c0_7], %12 {strides = array<i32>} : memref<48x8xbf16, #tpu.memory_space<vmem>>, vector<48x8xbf16>,
    return
  }
  func.func @transform_0(%arg0: i32) -> (i32, i32) {
    %c0_i32 = arith.constant 0 : i32
    %c0_i32_0 = arith.constant 0 : i32
    return %arg0, %c0_i32 : i32, i32
  }
  func.func @transform_1(%arg0: i32) -> (i32, i32) {
    %c0_i32 = arith.constant 0 : i32
    %c0_i32_0 = arith.constant 0 : i32
    %c0_i32_1 = arith.constant 0 : i32
    return %c0_i32, %c0_i32_0 : i32, i32
  }
  func.func @transform_2(%arg0: i32) -> (i32, i32) {
    %c0_i32 = arith.constant 0 : i32
    %c0_i32_0 = arith.constant 0 : i32
    return %arg0, %c0_i32 : i32, i32
  }
}

module attributes {stable_mosaic.version = 11 : i64} {
  func.func @_up_phase_kernel(%arg0: i32, %arg1: memref<48x128xbf16, #tpu.memory_space<vmem>>, %arg2: memref<4x32x4xbf16, #tpu.memory_space<vmem>>, %arg3: memref<48x16xf32, #tpu.memory_space<vmem>>, %arg4: memref<1x2x16xf32, #tpu.memory_space<vmem>>) attributes {dimension_semantics = [#tpu.dimension_semantics<parallel>], iteration_bounds = array<i64: 3>, scalar_prefetch = 0 : i64, scratch_operands = 0 : i64, tpu.core_type = #tpu.core_type<tc>, window_params = [{transform_indices = @transform_0, window_bounds = array<i64: 48, 128>}, {pipeline_mode = #tpu.pipeline_mode<synchronous>, transform_indices = @transform_1, window_bounds = array<i64: 4, 32, 4>}, {transform_indices = @transform_2, window_bounds = array<i64: 48, 16>}, {transform_indices = @transform_3, window_bounds = array<i64: 1, 2, 16>}]} {
    %c0 = arith.constant 0 : index
    %c0_0 = arith.constant 0 : index
    %0 = vector.load %arg1[%c0, %c0_0] : memref<48x128xbf16, #tpu.memory_space<vmem>>, vector<48x32xbf16>
    %c0_1 = arith.constant 0 : index
    %c0_2 = arith.constant 0 : index
    %c0_3 = arith.constant 0 : index
    %1 = vector.load %arg2[%c0_1, %c0_2, %c0_3] : memref<4x32x4xbf16, #tpu.memory_space<vmem>>, vector<1x32x4xbf16>
    %2 = vector.shape_cast %1 : vector<1x32x4xbf16> to vector<32x4xbf16>
    %cst = arith.constant dense<0.000000e+00> : vector<48x4xf32>
    %3 = tpu.matmul %0, %2, %cst {dimension_numbers = #tpu.dot_dimension_numbers<[1], [0], [0], [1], [0, 0, 1, 1], [], []>} : vector<48x32xbf16>, vector<32x4xbf16>, vector<48x4xf32> -> vector<48x4xf32>
    %c0_4 = arith.constant 0 : index
    %c32 = arith.constant 32 : index
    %4 = vector.load %arg1[%c0_4, %c32] : memref<48x128xbf16, #tpu.memory_space<vmem>>, vector<48x32xbf16>
    %c1 = arith.constant 1 : index
    %c0_5 = arith.constant 0 : index
    %c0_6 = arith.constant 0 : index
    %5 = vector.load %arg2[%c1, %c0_5, %c0_6] : memref<4x32x4xbf16, #tpu.memory_space<vmem>>, vector<1x32x4xbf16>
    %6 = vector.shape_cast %5 : vector<1x32x4xbf16> to vector<32x4xbf16>
    %cst_7 = arith.constant dense<0.000000e+00> : vector<48x4xf32>
    %7 = tpu.matmul %4, %6, %cst_7 {dimension_numbers = #tpu.dot_dimension_numbers<[1], [0], [0], [1], [0, 0, 1, 1], [], []>} : vector<48x32xbf16>, vector<32x4xbf16>, vector<48x4xf32> -> vector<48x4xf32>
    %c0_8 = arith.constant 0 : index
    %c64 = arith.constant 64 : index
    %8 = vector.load %arg1[%c0_8, %c64] : memref<48x128xbf16, #tpu.memory_space<vmem>>, vector<48x32xbf16>
    %c2 = arith.constant 2 : index
    %c0_9 = arith.constant 0 : index
    %c0_10 = arith.constant 0 : index
    %9 = vector.load %arg2[%c2, %c0_9, %c0_10] : memref<4x32x4xbf16, #tpu.memory_space<vmem>>, vector<1x32x4xbf16>
    %10 = vector.shape_cast %9 : vector<1x32x4xbf16> to vector<32x4xbf16>
    %cst_11 = arith.constant dense<0.000000e+00> : vector<48x4xf32>
    %11 = tpu.matmul %8, %10, %cst_11 {dimension_numbers = #tpu.dot_dimension_numbers<[1], [0], [0], [1], [0, 0, 1, 1], [], []>} : vector<48x32xbf16>, vector<32x4xbf16>, vector<48x4xf32> -> vector<48x4xf32>
    %c0_12 = arith.constant 0 : index
    %c96 = arith.constant 96 : index
    %12 = vector.load %arg1[%c0_12, %c96] : memref<48x128xbf16, #tpu.memory_space<vmem>>, vector<48x32xbf16>
    %c3 = arith.constant 3 : index
    %c0_13 = arith.constant 0 : index
    %c0_14 = arith.constant 0 : index
    %13 = vector.load %arg2[%c3, %c0_13, %c0_14] : memref<4x32x4xbf16, #tpu.memory_space<vmem>>, vector<1x32x4xbf16>
    %14 = vector.shape_cast %13 : vector<1x32x4xbf16> to vector<32x4xbf16>
    %cst_15 = arith.constant dense<0.000000e+00> : vector<48x4xf32>
    %15 = tpu.matmul %12, %14, %cst_15 {dimension_numbers = #tpu.dot_dimension_numbers<[1], [0], [0], [1], [0, 0, 1, 1], [], []>} : vector<48x32xbf16>, vector<32x4xbf16>, vector<48x4xf32> -> vector<48x4xf32>
    %16 = tpu.concatenate %3, %7, %11, %15 in 1 : vector<48x4xf32>, vector<48x4xf32>, vector<48x4xf32>, vector<48x4xf32> -> vector<48x16xf32>
    %c0_16 = arith.constant 0 : index
    %c0_17 = arith.constant 0 : index
    %17 = vector.load %arg3[%c0_16, %c0_17] : memref<48x16xf32, #tpu.memory_space<vmem>>, vector<48x16xf32>
    tpu.vector_store %arg3[%c0_16, %c0_17], %16 {strides = array<i32>} : memref<48x16xf32, #tpu.memory_space<vmem>>, vector<48x16xf32>,
    %cst_18 = arith.constant dense<0.000000e+00> : vector<16xf32>
    %18 = vector.multi_reduction <add>, %16, %cst_18 [0] : vector<48x16xf32> to vector<16xf32>
    %19 = vector.shape_cast %18 : vector<16xf32> to vector<1x16xf32>
    %20 = arith.mulf %16, %16 : vector<48x16xf32>
    %cst_19 = arith.constant dense<0.000000e+00> : vector<16xf32>
    %21 = vector.multi_reduction <add>, %20, %cst_19 [0] : vector<48x16xf32> to vector<16xf32>
    %22 = vector.shape_cast %21 : vector<16xf32> to vector<1x16xf32>
    %23 = tpu.concatenate %19, %22 in 0 : vector<1x16xf32>, vector<1x16xf32> -> vector<2x16xf32>
    %24 = vector.shape_cast %23 : vector<2x16xf32> to vector<1x2x16xf32>
    %c0_20 = arith.constant 0 : index
    %c0_21 = arith.constant 0 : index
    %c0_22 = arith.constant 0 : index
    %25 = vector.load %arg4[%c0_20, %c0_21, %c0_22] : memref<1x2x16xf32, #tpu.memory_space<vmem>>, vector<1x2x16xf32>
    tpu.vector_store %arg4[%c0_20, %c0_21, %c0_22], %24 {strides = array<i32>} : memref<1x2x16xf32, #tpu.memory_space<vmem>>, vector<1x2x16xf32>,
    return
  }
  func.func @transform_0(%arg0: i32) -> (i32, i32) {
    %c0_i32 = arith.constant 0 : i32
    %c0_i32_0 = arith.constant 0 : i32
    return %arg0, %c0_i32 : i32, i32
  }
  func.func @transform_1(%arg0: i32) -> (i32, i32, i32) {
    %c0_i32 = arith.constant 0 : i32
    %c0_i32_0 = arith.constant 0 : i32
    %c0_i32_1 = arith.constant 0 : i32
    %c0_i32_2 = arith.constant 0 : i32
    return %c0_i32, %c0_i32_0, %c0_i32_1 : i32, i32, i32
  }
  func.func @transform_2(%arg0: i32) -> (i32, i32) {
    %c0_i32 = arith.constant 0 : i32
    %c0_i32_0 = arith.constant 0 : i32
    return %arg0, %c0_i32 : i32, i32
  }
  func.func @transform_3(%arg0: i32) -> (i32, i32, i32) {
    %c0_i32 = arith.constant 0 : i32
    %c0_i32_0 = arith.constant 0 : i32
    %c0_i32_1 = arith.constant 0 : i32
    return %arg0, %c0_i32, %c0_i32_0 : i32, i32, i32
  }
}

module attributes {stable_mosaic.version = 11 : i64} {
  func.func @_bn_apply_kernel(%arg0: i32, %arg1: memref<16x128xf32, #tpu.memory_space<vmem>>, %arg2: memref<1x128xf32, #tpu.memory_space<vmem>>, %arg3: memref<1x128xf32, #tpu.memory_space<vmem>>, %arg4: memref<16x128xf32, #tpu.memory_space<vmem>>) attributes {dimension_semantics = [#tpu.dimension_semantics<parallel>], iteration_bounds = array<i64: 1>, scalar_prefetch = 0 : i64, scratch_operands = 0 : i64, tpu.core_type = #tpu.core_type<tc>, window_params = [{transform_indices = @transform_0, window_bounds = array<i64: 16, 128>}, {pipeline_mode = #tpu.pipeline_mode<synchronous>, transform_indices = @transform_1, window_bounds = array<i64: 1, 128>}, {pipeline_mode = #tpu.pipeline_mode<synchronous>, transform_indices = @transform_2, window_bounds = array<i64: 1, 128>}, {transform_indices = @transform_3, window_bounds = array<i64: 16, 128>}]} {
    %c0 = arith.constant 0 : index
    %c0_0 = arith.constant 0 : index
    %0 = vector.load %arg1[%c0, %c0_0] : memref<16x128xf32, #tpu.memory_space<vmem>>, vector<16x128xf32>
    %c0_1 = arith.constant 0 : index
    %c0_2 = arith.constant 0 : index
    %1 = vector.load %arg2[%c0_1, %c0_2] : memref<1x128xf32, #tpu.memory_space<vmem>>, vector<1x128xf32>
    %2 = vector.broadcast %1 : vector<1x128xf32> to vector<16x128xf32>
    %3 = arith.mulf %0, %2 : vector<16x128xf32>
    %c0_3 = arith.constant 0 : index
    %c0_4 = arith.constant 0 : index
    %4 = vector.load %arg3[%c0_3, %c0_4] : memref<1x128xf32, #tpu.memory_space<vmem>>, vector<1x128xf32>
    %5 = vector.broadcast %4 : vector<1x128xf32> to vector<16x128xf32>
    %6 = arith.addf %3, %5 : vector<16x128xf32>
    %c0_5 = arith.constant 0 : index
    %c0_6 = arith.constant 0 : index
    %7 = vector.load %arg4[%c0_5, %c0_6] : memref<16x128xf32, #tpu.memory_space<vmem>>, vector<16x128xf32>
    tpu.vector_store %arg4[%c0_5, %c0_6], %6 {strides = array<i32>} : memref<16x128xf32, #tpu.memory_space<vmem>>, vector<16x128xf32>,
    return
  }
  func.func @transform_0(%arg0: i32) -> (i32, i32) {
    %c0_i32 = arith.constant 0 : i32
    %c0_i32_0 = arith.constant 0 : i32
    return %arg0, %c0_i32 : i32, i32
  }
  func.func @transform_1(%arg0: i32) -> (i32, i32) {
    %c0_i32 = arith.constant 0 : i32
    %c0_i32_0 = arith.constant 0 : i32
    %c0_i32_1 = arith.constant 0 : i32
    return %c0_i32, %c0_i32_0 : i32, i32
  }
  func.func @transform_2(%arg0: i32) -> (i32, i32) {
    %c0_i32 = arith.constant 0 : i32
    %c0_i32_0 = arith.constant 0 : i32
    %c0_i32_1 = arith.constant 0 : i32
    return %c0_i32, %c0_i32_0 : i32, i32
  }
  func.func @transform_3(%arg0: i32) -> (i32, i32) {
    %c0_i32 = arith.constant 0 : i32
    %c0_i32_0 = arith.constant 0 : i32
    return %arg0, %c0_i32 : i32, i32
  }
}

</mosaic_0001>

<llo_original>
// kernel: unet_innermost_block.3
$region0: #{unet_innermost_block.3}
  #allocation0 [shape = 'u32[]', space=smem, size = 0x4, offset = 0x4, fixed_abs, tag = 'smem constant byte address 0x4 - core index']
  #allocation1 [shape = 'u32[144,128]{1,0:T(1,128)}', space=vmem, size = 0x12000, scoped, tag = 'internal scratch']
  %s0 = inlined_call_operand.vmem [shape: bf16[144,64], index: 0, kind: input, shape index: {}]
  %s1 = inlined_call_operand.vmem [shape: bf16[64,8], index: 1, kind: input, shape index: {}]
  %s2 = inlined_call_operand.vmem [shape: bf16[144,8], index: 2, kind: output, shape index: {}]
  %s3 = sld [smem:[#allocation0]]
  $region41: #{unet_innermost_block.3} parent=0
    _
  %s5 = ssub.s32 1, %s3
  %s6 = scalar_select 0, %s5, %s3
  loop: start=0, step=1, limit=5
  $region2: #{unet_innermost_block.3} parent=0 // loop_pre_header
    _
  $region3: #{unet_innermost_block.3} parent=0 // loop_header
    %s8 = sphi 0, %s12
    %p9 = scmp.ge.s32.totalorder %s8, 5
    %s18 = sphi 0, %s20
    %s21 = sphi 0, %s18
    %s22 = sphi 0, %s21
    %s38 = sphi 0, %s22
    %s42 = sphi 0, %s42
    %s44 = sphi 0, %s42
    %s45 = sphi 0, %s44
    %s59 = sphi 0, %s45
    %s65 = sphi 0, %s67
    %s68 = sphi 0, %s65
    %s69 = sphi 0, %s68
    %s85 = sphi 0, %s69
  $region4: #{unet_innermost_block.3} parent=0 // loop_header_branch
    %11 = sbr.rel (%p9) target = $region8
  $region5: #{unet_innermost_block.3} parent=0 // loop_body
    %s13 = ssub.s32 %s8, 1
    %s14 = ssub.s32 %s8, 2
    %s15 = sadd.s32 %s8, 1
    %s16 = ssub.s32 %s8, %s15
    %p17 = scmp.eq.s32.totalorder %s16, 0
    %s19 = sadd.s32 %s18, 1
    %s20 = scalar_select %p17, %s18, %s19
    %p23 = pneg %p17
    %p24 = scmp.eq.s32.totalorder %s8, 2
    %p25 = por %p23, %p24
    %p26 = scmp.ne.s32.totalorder %s18, %s21
    %p27 = scmp.eq.s32.totalorder %s8, 0
    %p28 = por %p26, %p27
    %p29 = scmp.ne.s32.totalorder %s18, %s21
    %p30 = scmp.eq.s32.totalorder %s13, 2
    %p31 = por %p29, %p30
    %p32 = scmp.ne.s32.totalorder %s21, %s22
    %p33 = scmp.eq.s32.totalorder %s13, 0
    %p34 = por %p32, %p33
    %p35 = scmp.ne.s32.totalorder %s21, %s22
    %p36 = scmp.eq.s32.totalorder %s14, 2
    %p37 = por %p35, %p36
    %p39 = scmp.ne.s32.totalorder %s22, %s38
    %p40 = scmp.eq.s32.totalorder %s14, 0
    %p41 = por %p39, %p40
    %s43 = sadd.s32 %s42, 1
    %p46 = scmp.eq.s32.totalorder %s8, 2
    %p47 = scmp.ne.s32.totalorder %s42, %s44
    %p48 = scmp.eq.s32.totalorder %s8, 0
    %p49 = por %p47, %p48
    %p50 = scmp.ne.s32.totalorder %s42, %s44
    %p51 = scmp.eq.s32.totalorder %s13, 2
    %p52 = por %p50, %p51
    %p53 = scmp.ne.s32.totalorder %s44, %s45
    %p54 = scmp.eq.s32.totalorder %s13, 0
    %p55 = por %p53, %p54
    %p56 = scmp.ne.s32.totalorder %s44, %s45
    %p57 = scmp.eq.s32.totalorder %s14, 2
    %p58 = por %p56, %p57
    %p60 = scmp.ne.s32.totalorder %s45, %s59
    %p61 = scmp.eq.s32.totalorder %s14, 0
    %p62 = por %p60, %p61
    %s63 = ssub.s32 %s8, %s15
    %p64 = scmp.eq.s32.totalorder %s63, 0
    %s66 = sadd.s32 %s65, 1
    %s67 = scalar_select %p64, %s65, %s66
    %p70 = pneg %p64
    %p71 = scmp.eq.s32.totalorder %s8, 2
    %p72 = por %p70, %p71
    %p73 = scmp.ne.s32.totalorder %s65, %s68
    %p74 = scmp.eq.s32.totalorder %s8, 0
    %p75 = por %p73, %p74
    %p76 = scmp.ne.s32.totalorder %s65, %s68
    %p77 = scmp.eq.s32.totalorder %s13, 2
    %p78 = por %p76, %p77
    %p79 = scmp.ne.s32.totalorder %s68, %s69
    %p80 = scmp.eq.s32.totalorder %s13, 0
    %p81 = por %p79, %p80
    %p82 = scmp.ne.s32.totalorder %s68, %s69
    %p83 = scmp.eq.s32.totalorder %s14, 2
    %p84 = por %p82, %p83
    %p86 = scmp.ne.s32.totalorder %s69, %s85
    %p87 = scmp.eq.s32.totalorder %s14, 0
    %p88 = por %p86, %p87
    %p89 = scmp.le.s32.totalorder 1, %s8
    %p90 = scmp.lt.s32.totalorder %s8, 4
    %p91 = pnand %p89, %p90
    %p92 = pneg %p91
    // Predicated region
    $region9: #{unet_innermost_block.3} parent=5 // pred_check
      _
    $region10: #{unet_innermost_block.3} parent=5 // pred_check_branch
      %94 = sbr.rel (%p91) target = $region12
    $region11: #{unet_innermost_block.3} parent=5 // pred_region
      %s95 = ssub.s32 %s8, 1
      // Predicated region
      $region13: #{unet_innermost_block.3} parent=11 // pred_check
        %p96 = pneg %p55
      $region14: #{unet_innermost_block.3} parent=11 // pred_check_branch
        %98 = sbr.rel (%p96) target = $region16
      $region15: #{unet_innermost_block.3} parent=11 // pred_region
        _
      $region16: #{unet_innermost_block.3} parent=11 // pred_fallthru
        _
    $region12: #{unet_innermost_block.3} parent=5 // pred_fallthru
      _
    %p99 = scmp.lt.s32.totalorder %s8, 3
    // Predicated region
    $region17: #{unet_innermost_block.3} parent=5 // pred_check
      %p100 = pneg %p99
    $region18: #{unet_innermost_block.3} parent=5 // pred_check_branch
      %102 = sbr.rel (%p100) target = $region20
    $region19: #{unet_innermost_block.3} parent=5 // pred_region
      // Predicated region
      $region21: #{unet_innermost_block.3} parent=19 // pred_check
        %p103 = pneg %p28
      $region22: #{unet_innermost_block.3} parent=19 // pred_check_branch
        %105 = sbr.rel (%p103) target = $region24
      $region23: #{unet_innermost_block.3} parent=19 // pred_region
        %s106 = smul.u32 6, %s8
        %p107 = scmp.lt.s32.totalorder %s106, 17
        %s108 = scalar_select %p107, %s106, 17
        %s109 = smul.addr %s108, 4
        %s110 = scalar_lea.vmem %s0, %s109
        %s111 = smul.u32 6, %s8
      $region24: #{unet_innermost_block.3} parent=19 // pred_fallthru
        _
    $region20: #{unet_innermost_block.3} parent=5 // pred_fallthru
      _
    %p112 = scmp.le.s32.totalorder 1, %s8
    %p113 = scmp.lt.s32.totalorder %s8, 4
    %p114 = pnand %p112, %p113
    %p115 = pneg %p114
    // Predicated region
    $region25: #{unet_innermost_block.3} parent=5 // pred_check
      _
    $region26: #{unet_innermost_block.3} parent=5 // pred_check_branch
      %117 = sbr.rel (%p114) target = $region28
    $region27: #{unet_innermost_block.3} parent=5 // pred_region
      %s118 = ssub.s32 %s8, 1
      %s119 = smul.u32 6, %s13
      %p120 = scmp.lt.s32.totalorder %s119, 17
      %s121 = scalar_select %p120, %s119, 17
      %s122 = smul.addr %s121, 4
      %s123 = scalar_lea.vmem %s0, %s122
      %p124 = pneg %p34
      %p125 = pneg %p31
      %p126 = pneg %p55
      %p127 = pneg %p52
      %p128 = pneg %p81
      %p129 = pneg %p78
      %s130 = smul.u32 6, %s13
      %p131 = scmp.lt.s32.totalorder %s130, 17
      %s132 = scalar_select %p131, %s130, 17
      %s133 = smul.addr %s132, 4
      %s134 = scalar_lea.vmem %s2, %s133
      %s135 = smul.u32 6, %s13
      %p136 = scmp.lt.s32.totalorder %s135, 17
      %s137 = scalar_select %p136, %s135, 17
      %s138 = smul.addr %s137, 4
      %s139 = scalar_lea.vmem %s0, %s138
      %s140 = smul.u32 6, %s13
      %s141 = smul.u32 6, %s13
      %p142 = scmp.lt.s32.totalorder %s141, 17
      %s143 = scalar_select %p142, %s141, 17
      %s144 = smul.addr %s143, 4
      %s145 = scalar_lea.vmem %s2, %s144
      %s146 = smul.u32 6, %s13
      %v148 = vld [vmem:[%s139] sm:$0xf]
      %v149 = vld [vmem:[%s139 + $0x4] sm:$0xf]
      %v150 = vld [vmem:[%s139 + $0x8] sm:$0xf]
      %v151 = vld [vmem:[%s139 + $0xc] sm:$0xf]
      %v152 = vld [vmem:[%s139 + $0x10] sm:$0xf]
      %v153 = vld [vmem:[%s139 + $0x14] sm:$0xf]
      %v154 = vunpack.c.l.bf16 %v148
      %v155 = vunpack.c.l.bf16 %v149
      %v156 = vunpack.c.l.bf16 %v150
      %v157 = vunpack.c.l.bf16 %v151
      %v158 = vunpack.c.l.bf16 %v152
      %v159 = vunpack.c.l.bf16 %v153
      %vm160 = vcmp.ge.f32.partialorder %v154, 0.0
      %vm161 = vcmp.ge.f32.partialorder %v155, 0.0
      %vm162 = vcmp.ge.f32.partialorder %v156, 0.0
      %vm163 = vcmp.ge.f32.partialorder %v157, 0.0
      %vm164 = vcmp.ge.f32.partialorder %v158, 0.0
      %vm165 = vcmp.ge.f32.partialorder %v159, 0.0
      %v166 = vmul.f32 %v154, 0.2
      %v167 = vmul.f32 %v155, 0.2
      %v168 = vmul.f32 %v156, 0.2
      %v169 = vmul.f32 %v157, 0.2
      %v170 = vmul.f32 %v158, 0.2
      %v171 = vmul.f32 %v159, 0.2
      %v172 = vsel %vm160, %v154, %v166
      %v173 = vsel %vm161, %v155, %v167
      %v174 = vsel %vm162, %v156, %v168
      %v175 = vsel %vm163, %v157, %v169
      %v176 = vsel %vm164, %v158, %v170
      %v177 = vsel %vm165, %v159, %v171
      %v178 = vpack.c.bf16 %v173, %v172
      %v179 = vpack.c.bf16 %v175, %v174
      %v180 = vpack.c.bf16 %v177, %v176
      %v181 = vld [vmem:[%s1] sm:$0xf]
      %v182 = vld [vmem:[%s1 + $0x4] sm:$0xf]
      %v183 = vld [vmem:[%s1 + $0x8] sm:$0xf]
      %v184 = vld [vmem:[%s1 + $0xc] sm:$0xf]
      %v185 = vld [vmem:[%s1 + $0x10] sm:$0xf]
      %v186 = vld [vmem:[%s1 + $0x14] sm:$0xf]
      %v187 = vld [vmem:[%s1 + $0x18] sm:$0xf]
      %v188 = vld [vmem:[%s1 + $0x1c] sm:$0xf]
      %v197 = vunpack.c.l.b16 %v181
      %v198 = vunpack.c.l.b16 %v182
      %v199 = vunpack.c.l.b16 %v183
      %v200 = vunpack.c.l.b16 %v184
      %v201 = vunpack.c.l.b16 %v185
      %v202 = vunpack.c.l.b16 %v186
      %v203 = vunpack.c.l.b16 %v187
      %v204 = vunpack.c.l.b16 %v188
      %v205 = vpack.c.b16 %v198, %v197
      %v206 = vpack.c.b16 %v200, %v199
      %v207 = vpack.c.b16 %v202, %v201
      %v208 = vpack.c.b16 %v204, %v203
      %vm213 = vcmask 523264
      %v215 = vsel %vm213, %v178, 0
      %v218 = vsel %vm213, %v179, 0
      %v221 = vsel %vm213, %v180, 0
      %223 = vmatprep.subr.bf16.mxu0 0
      %224 = vmatpush1.bf16.msra.mxu0 0
      %225 = vmatprep.subr.bf16.mxu0 0
      %226 = vmatpush1.bf16.msra.mxu0 0
      %227 = vmatprep.subr.bf16.mxu0 0
      %228 = vmatpush1.bf16.msra.mxu0 0
      %229 = vmatprep.subr.bf16.mxu0 0
      %230 = vmatpush1.bf16.msra.mxu0 0
      %231 = vmatprep.subr.bf16.mxu0 0
      %232 = vmatpush1.bf16.msra.mxu0 %v208
      %233 = vmatprep.subr.bf16.mxu0 0
      %234 = vmatpush1.bf16.msra.mxu0 %v207
      %235 = vmatprep.subr.bf16.mxu0 0
      %236 = vmatpush1.bf16.msra.mxu0 %v206
      %237 = vmatprep.subr.bf16.mxu0 0
      %238 = vmatpush1.bf16.msra.mxu0 %v205
      %239 = vmatprep.subr.bf16.mxu0 0
      %240 = vmatpush2.bf16.msra.mxu0 0
      %241 = vmatprep.subr.bf16.mxu0 0
      %242 = vmatpush2.bf16.msra.mxu0 0
      %243 = vmatprep.subr.bf16.mxu0 0
      %244 = vmatpush2.bf16.msra.mxu0 0
      %245 = vmatprep.subr.bf16.mxu0 0
      %246 = vmatpush2.bf16.msra.mxu0 0
      %247 = vmatprep.subr.bf16.mxu0 0
      %248 = vmatpush2.bf16.msra.mxu0 0
      %249 = vmatprep.subr.bf16.mxu0 0
      %250 = vmatpush2.bf16.msra.mxu0 0
      %251 = vmatprep.subr.bf16.mxu0 0
      %252 = vmatpush2.bf16.msra.mxu0 0
      %253 = vmatprep.subr.bf16.mxu0 0
      %254 = vmatpush2.bf16.msra.mxu0 0
      %255 = vmatprep.mubr.bf16.mxu0 0
      %256 = vmatmul.mubr.bf16.gmra.mxu0 %v215
      %v257 = vpop.f32.mrf.mxu0
      %v258 = vadd.f32 0.0, %v257
      %v259 = vpop.f32.mrf.mxu0
      %v260 = vpop.f32.mrf.mxu0
      %v261 = vadd.f32 0.0, %v260
      %v262 = vpop.f32.mrf.mxu0
      %263 = vmatprep.mubr.bf16.mxu0 0
      %264 = vmatmul.mubr.bf16.gmra.mxu0 %v218
      %v265 = vpop.f32.mrf.mxu0
      %v266 = vadd.f32 0.0, %v265
      %v267 = vpop.f32.mrf.mxu0
      %v268 = vpop.f32.mrf.mxu0
      %v269 = vadd.f32 0.0, %v268
      %v270 = vpop.f32.mrf.mxu0
      %271 = vmatprep.mubr.bf16.mxu0 0
      %272 = vmatmul.mubr.bf16.gmra.mxu0 %v221
      %v273 = vpop.f32.mrf.mxu0
      %v274 = vadd.f32 0.0, %v273
      %v275 = vpop.f32.mrf.mxu0
      %v276 = vpop.f32.mrf.mxu0
      %v277 = vadd.f32 0.0, %v276
      %v278 = vpop.f32.mrf.mxu0
      %279 = vdwg.mxu0
      %v280 = vmax.f32 %v258, 0.0
      %v281 = vmax.f32 %v261, 0.0
      %v282 = vmax.f32 %v266, 0.0
      %v283 = vmax.f32 %v269, 0.0
      %v284 = vmax.f32 %v274, 0.0
      %v285 = vmax.f32 %v277, 0.0
      %v286 = vpack.c.bf16 %v281, %v280
      %v287 = vpack.c.bf16 %v283, %v282
      %v288 = vpack.c.bf16 %v285, %v284
      %v292 = vunpack.c.l.b16 %v286
      %v293 = vunpack.c.h.b16 %v286
      %v294 = vunpack.c.l.b16 %v287
      %v295 = vunpack.c.h.b16 %v287
      %v296 = vunpack.c.l.b16 %v288
      %v297 = vunpack.c.h.b16 %v288
      %v298 = vpack.c.b16 %v292, %v292
      %v299 = vpack.c.b16 %v293, %v293
      %v300 = vpack.c.b16 %v294, %v294
      %v301 = vpack.c.b16 %v295, %v295
      %v302 = vpack.c.b16 %v296, %v296
      %v303 = vpack.c.b16 %v297, %v297
      %vm310 = vcmask 60416
      %311 = vst.msk [vmem:[%s145] sm:$0xf] %vm310, %v298
      %312 = vst.msk [vmem:[%s145 + $0x4] sm:$0xf] %vm310, %v299
      %313 = vst.msk [vmem:[%s145 + $0x8] sm:$0xf] %vm310, %v300
      %314 = vst.msk [vmem:[%s145 + $0xc] sm:$0xf] %vm310, %v301
      %315 = vst.msk [vmem:[%s145 + $0x10] sm:$0xf] %vm310, %v302
      %316 = vst.msk [vmem:[%s145 + $0x14] sm:$0xf] %vm310, %v303
      %s317 = smul.u32 6, %s13
      %p318 = scmp.lt.s32.totalorder %s317, 17
      %s319 = scalar_select %p318, %s317, 17
      %s320 = smul.addr %s319, 4
      %s321 = scalar_lea.vmem %s2, %s320
      // Predicated region
      $region29: #{unet_innermost_block.3} parent=27 // pred_check
        %p322 = pneg %p78
      $region30: #{unet_innermost_block.3} parent=27 // pred_check_branch
        %324 = sbr.rel (%p322) target = $region32
      $region31: #{unet_innermost_block.3} parent=27 // pred_region
        %s325 = smul.u32 6, %s13
      $region32: #{unet_innermost_block.3} parent=27 // pred_fallthru
        _
    $region28: #{unet_innermost_block.3} parent=5 // pred_fallthru
      _
    %p326 = scmp.le.s32.totalorder 2, %s8
    // Predicated region
    $region33: #{unet_innermost_block.3} parent=5 // pred_check
      %p327 = pneg %p326
    $region34: #{unet_innermost_block.3} parent=5 // pred_check_branch
      %329 = sbr.rel (%p327) target = $region36
    $region35: #{unet_innermost_block.3} parent=5 // pred_region
      %s330 = ssub.s32 %s8, 2
      // Predicated region
      $region37: #{unet_innermost_block.3} parent=35 // pred_check
        %p331 = pneg %p84
      $region38: #{unet_innermost_block.3} parent=35 // pred_check_branch
        %333 = sbr.rel (%p331) target = $region40
      $region39: #{unet_innermost_block.3} parent=35 // pred_region
        %s334 = smul.u32 6, %s14
        %p335 = scmp.lt.s32.totalorder %s334, 17
        %s336 = scalar_select %p335, %s334, 17
        %s337 = smul.addr %s336, 4
        %s338 = scalar_lea.vmem %s2, %s337
      $region40: #{unet_innermost_block.3} parent=35 // pred_fallthru
        _
    $region36: #{unet_innermost_block.3} parent=5 // pred_fallthru
      _
  $region6: #{unet_innermost_block.3} parent=0 // loop_footer
    %s12 = sadd.s32 1, %s8
  $region7: #{unet_innermost_block.3} parent=0 // loop_footer_branch
    %7 = sbr.rel target = $region3
  $region8: #{unet_innermost_block.3} parent=0 // loop_exit
    _

// kernel: squeeze.34
$region0: #{squeeze.34}
  %s0 = inlined_call_operand.vmem [shape: f32[16], index: 0, kind: input, shape index: {}]
  %s1 = inlined_call_operand.vmem [shape: f32[4,4], index: 1, kind: output, shape index: {}]
  $region1: #{squeeze.34} parent=0
    #allocation0 [shape = 'u8[4096]{0}', space=vmem, size = 0x1000, scoped, tag = 'scoped mem for output reshape']
    #allocation1 [shape = 'u8[4096]{0}', space=vmem, size = 0x1000, scoped, tag = 'scoped mem for input reshape']
    %s3 = sshll.u32 1, 1
    %s4 = ssub.s32 %s3, 1
    %v5 = vld [vmem:[%s0] sm:%s4]
    %6 = vst [vmem:[#allocation1] sm:%s4] %v5
    %v7 = vld [vmem:[#allocation1] sm:$0x1]
    %vm8 = vcmask 31744
    %9 = vst.msk [vmem:[#allocation0] sm:$0x1] %vm8, %v7
    %v10 = vld [vmem:[#allocation1] sm:$0x1]
    %11 = vrot.lane.b32.xlu0 %v10, 124
    %v12 = vpop.permute.xlu0 %11
    %vm13 = vcmask 31744
    %s14 = scalar_lea.vmem [#allocation0], 1
    %15 = vst.msk [vmem:[%s14] sm:$0x1] %vm13, %v12
    %v16 = vld [vmem:[#allocation1] sm:$0x1]
    %17 = vrot.lane.b32.xlu0 %v16, 120
    %v18 = vpop.permute.xlu0 %17
    %vm19 = vcmask 31744
    %s20 = scalar_lea.vmem [#allocation0], 2
    %21 = vst.msk [vmem:[%s20] sm:$0x1] %vm19, %v18
    %v22 = vld [vmem:[#allocation1] sm:$0x1]
    %23 = vrot.lane.b32.xlu0 %v22, 116
    %v24 = vpop.permute.xlu0 %23
    %vm25 = vcmask 31744
    %s26 = scalar_lea.vmem [#allocation0], 3
    %27 = vst.msk [vmem:[%s26] sm:$0x1] %vm25, %v24
    %s29 = sshll.u32 1, 4
    %s30 = ssub.s32 %s29, 1
    %v32 = vld [vmem:[#allocation0] sm:%s30]
    %s33 = sshll.u32 1, 4
    %s34 = ssub.s32 %s33, 1
    %35 = vst [vmem:[%s1] sm:%s34] %v32

// kernel: tile.30
$region0: #{tile.30}
  #allocation0 [shape = 's32[1]{0}', space=sflag, size = 0x4, scoped, tag = 'scoped memory for tile.30']
  %s0 = inlined_call_operand.vmem [shape: f32[4], index: 0, kind: input, shape index: {}]
  %s1 = inlined_call_operand.vmem [shape: f32[4,4], index: 1, kind: output, shape index: {}]
  // Predicated region
  $region2: #{tile.30} parent=0 // pred_check
    _
  $region3: #{tile.30} parent=0 // pred_check_branch
    %3 = sbr.rel (0) target = $region5
  $region4: #{tile.30} parent=0 // pred_region
    _
  $region5: #{tile.30} parent=0 // pred_fallthru
    _
  %v4 = vld [vmem:[%s0] ss:$0 sm:$0xff]
  %5 = vst [vmem:[%s1] sm:$0xf] %v4

// kernel: tile.33
$region0: #{tile.33}
  %s0 = inlined_call_operand.vmem [shape: f32[4,4], index: 0, kind: input, shape index: {}]
  %s1 = inlined_call_operand.vmem [shape: f32[16], index: 1, kind: output, shape index: {}]
  $region1: #{tile.33} parent=0
    #allocation0 [shape = 'u8[4096]{0}', space=vmem, size = 0x1000, scoped, tag = 'scoped mem for output reshape']
    #allocation1 [shape = 'u8[4096]{0}', space=vmem, size = 0x1000, scoped, tag = 'scoped mem for input reshape']
    %s3 = sshll.u32 1, 4
    %s4 = ssub.s32 %s3, 1
    %v5 = vld [vmem:[%s0] sm:%s4]
    %6 = vst [vmem:[#allocation1] sm:%s4] %v5
    %v7 = vld [vmem:[#allocation1] sm:$0x1]
    %vm8 = vcmask 31744
    %9 = vst.msk [vmem:[#allocation0] sm:$0x1] %vm8, %v7
    %s10 = scalar_lea.vmem [#allocation1], 3
    %v11 = vld [vmem:[%s10] sm:$0x1]
    %12 = vrot.lane.b32.xlu0 %v11, 12
    %v13 = vpop.permute.xlu0 %12
    %vm14 = vcmask 130144
    %15 = vst.msk [vmem:[#allocation0] sm:$0x1] %vm14, %v13
    %s16 = scalar_lea.vmem [#allocation1], 2
    %v17 = vld [vmem:[%s16] sm:$0x1]
    %18 = vrot.lane.b32.xlu0 %v17, 8
    %v19 = vpop.permute.xlu0 %18
    %vm20 = vcmask 97344
    %21 = vst.msk [vmem:[#allocation0] sm:$0x1] %vm20, %v19
    %s22 = scalar_lea.vmem [#allocation1], 1
    %v23 = vld [vmem:[%s22] sm:$0x1]
    %24 = vrot.lane.b32.xlu0 %v23, 4
    %v25 = vpop.permute.xlu0 %24
    %vm26 = vcmask 64544
    %27 = vst.msk [vmem:[#allocation0] sm:$0x1] %vm26, %v25
    %s29 = sshll.u32 1, 1
    %s30 = ssub.s32 %s29, 1
    %v32 = vld [vmem:[#allocation0] sm:%s30]
    %s33 = sshll.u32 1, 1
    %s34 = ssub.s32 %s33, 1
    %35 = vst [vmem:[%s1] sm:%s34] %v32

// kernel: tile.25
$region0: #{tile.25}
  #allocation0 [shape = 's32[1]{0}', space=sflag, size = 0x4, scoped, tag = 'scoped memory for tile.25']
  %s0 = inlined_call_operand.vmem [shape: f32[16], index: 0, kind: input, shape index: {}]
  %s1 = inlined_call_operand.vmem [shape: f32[8,16], index: 1, kind: output, shape index: {}]
  // Predicated region
  $region2: #{tile.25} parent=0 // pred_check
    _
  $region3: #{tile.25} parent=0 // pred_check_branch
    %3 = sbr.rel (0) target = $region5
  $region4: #{tile.25} parent=0 // pred_region
    _
  $region5: #{tile.25} parent=0 // pred_fallthru
    _
  %v4 = vld [vmem:[%s0] ss:$0 sm:$0xff]
  %5 = vst [vmem:[%s1] sm:$0xff] %v4

// kernel: tile.26
$region0: #{tile.26}
  %s0 = inlined_call_operand.vmem [shape: f32[8,16], index: 0, kind: input, shape index: {}]
  %s1 = inlined_call_operand.vmem [shape: f32[1,128], index: 1, kind: output, shape index: {}]
  $region1: #{tile.26} parent=0
    #allocation0 [shape = 'u8[4096]{0}', space=vmem, size = 0x1000, scoped, tag = 'scoped mem for output reshape']
    %v2 = vld [vmem:[%s0] sm:$0x1]
    %vm3 = vcmask 130048
    %4 = vst.msk [vmem:[#allocation0] sm:$0x1] %vm3, %v2
    %s5 = scalar_lea.vmem %s0, 7
    %v6 = vld [vmem:[%s5] sm:$0x1]
    %7 = vrot.lane.b32.xlu0 %v6, 112
    %v8 = vpop.permute.xlu0 %7
    %vm9 = vcmask 1048448
    %10 = vst.msk [vmem:[#allocation0] sm:$0x1] %vm9, %v8
    %s11 = scalar_lea.vmem %s0, 6
    %v12 = vld [vmem:[%s11] sm:$0x1]
    %13 = vrot.lane.b32.xlu0 %v12, 96
    %v14 = vpop.permute.xlu0 %13
    %vm15 = vcmask 917248
    %16 = vst.msk [vmem:[#allocation0] sm:$0x1] %vm15, %v14
    %s17 = scalar_lea.vmem %s0, 5
    %v18 = vld [vmem:[%s17] sm:$0x1]
    %19 = vrot.lane.b32.xlu0 %v18, 80
    %v20 = vpop.permute.xlu0 %19
    %vm21 = vcmask 786048
    %22 = vst.msk [vmem:[#allocation0] sm:$0x1] %vm21, %v20
    %s23 = scalar_lea.vmem %s0, 4
    %v24 = vld [vmem:[%s23] sm:$0x1]
    %25 = vrot.lane.b32.xlu0 %v24, 64
    %v26 = vpop.permute.xlu0 %25
    %vm27 = vcmask 654848
    %28 = vst.msk [vmem:[#allocation0] sm:$0x1] %vm27, %v26
    %s29 = scalar_lea.vmem %s0, 3
    %v30 = vld [vmem:[%s29] sm:$0x1]
    %31 = vrot.lane.b32.xlu0 %v30, 48
    %v32 = vpop.permute.xlu0 %31
    %vm33 = vcmask 523648
    %34 = vst.msk [vmem:[#allocation0] sm:$0x1] %vm33, %v32
    %s35 = scalar_lea.vmem %s0, 2
    %v36 = vld [vmem:[%s35] sm:$0x1]
    %37 = vrot.lane.b32.xlu0 %v36, 32
    %v38 = vpop.permute.xlu0 %37
    %vm39 = vcmask 392448
    %40 = vst.msk [vmem:[#allocation0] sm:$0x1] %vm39, %v38
    %s41 = scalar_lea.vmem %s0, 1
    %v42 = vld [vmem:[%s41] sm:$0x1]
    %43 = vrot.lane.b32.xlu0 %v42, 16
    %v44 = vpop.permute.xlu0 %43
    %vm45 = vcmask 261248
    %46 = vst.msk [vmem:[#allocation0] sm:$0x1] %vm45, %v44
    %s48 = sshll.u32 1, 1
    %s49 = ssub.s32 %s48, 1
    %v51 = vld [vmem:[#allocation0] sm:%s49]
    %s52 = sshll.u32 1, 1
    %s53 = ssub.s32 %s52, 1
    %54 = vst [vmem:[%s1] sm:%s53] %v51

// kernel: unet_innermost_block.4
$region0: #{unet_innermost_block.4}
  #allocation0 [shape = 'u32[]', space=smem, size = 0x4, offset = 0x4, fixed_abs, tag = 'smem constant byte address 0x4 - core index']
  #allocation1 [shape = 'u32[144,128]{1,0:T(1,128)}', space=vmem, size = 0x12000, scoped, tag = 'internal scratch']
  %s0 = inlined_call_operand.vmem [shape: bf16[144,128], index: 0, kind: input, shape index: {}]
  %s1 = inlined_call_operand.vmem [shape: bf16[4,32,4], index: 1, kind: input, shape index: {}]
  %s2 = inlined_call_operand.vmem [shape: f32[144,16], index: 2, kind: output, shape index: {0}]
  %s3 = inlined_call_operand.vmem [shape: f32[3,2,16], index: 3, kind: output, shape index: {1}]
  %4 = xla_tuple %s2, %s3
  %s5 = sld [smem:[#allocation0]]
  $region49: #{unet_innermost_block.4} parent=0
    _
  %s7 = ssub.s32 1, %s5
  %s8 = scalar_select 0, %s7, %s5
  loop: start=0, step=1, limit=5
  $region2: #{unet_innermost_block.4} parent=0 // loop_pre_header
    _
  $region3: #{unet_innermost_block.4} parent=0 // loop_header
    %s10 = sphi 0, %s14
    %p11 = scmp.ge.s32.totalorder %s10, 5
    %s20 = sphi 0, %s22
    %s23 = sphi 0, %s20
    %s24 = sphi 0, %s23
    %s40 = sphi 0, %s24
    %s44 = sphi 0, %s44
    %s46 = sphi 0, %s44
    %s47 = sphi 0, %s46
    %s61 = sphi 0, %s47
    %s67 = sphi 0, %s69
    %s70 = sphi 0, %s67
    %s71 = sphi 0, %s70
    %s87 = sphi 0, %s71
    %s93 = sphi 0, %s95
    %s96 = sphi 0, %s93
    %s97 = sphi 0, %s96
    %s113 = sphi 0, %s97
  $region4: #{unet_innermost_block.4} parent=0 // loop_header_branch
    %13 = sbr.rel (%p11) target = $region8
  $region5: #{unet_innermost_block.4} parent=0 // loop_body
    %s15 = ssub.s32 %s10, 1
    %s16 = ssub.s32 %s10, 2
    %s17 = sadd.s32 %s10, 1
    %s18 = ssub.s32 %s10, %s17
    %p19 = scmp.eq.s32.totalorder %s18, 0
    %s21 = sadd.s32 %s20, 1
    %s22 = scalar_select %p19, %s20, %s21
    %p25 = pneg %p19
    %p26 = scmp.eq.s32.totalorder %s10, 2
    %p27 = por %p25, %p26
    %p28 = scmp.ne.s32.totalorder %s20, %s23
    %p29 = scmp.eq.s32.totalorder %s10, 0
    %p30 = por %p28, %p29
    %p31 = scmp.ne.s32.totalorder %s20, %s23
    %p32 = scmp.eq.s32.totalorder %s15, 2
    %p33 = por %p31, %p32
    %p34 = scmp.ne.s32.totalorder %s23, %s24
    %p35 = scmp.eq.s32.totalorder %s15, 0
    %p36 = por %p34, %p35
    %p37 = scmp.ne.s32.totalorder %s23, %s24
    %p38 = scmp.eq.s32.totalorder %s16, 2
    %p39 = por %p37, %p38
    %p41 = scmp.ne.s32.totalorder %s24, %s40
    %p42 = scmp.eq.s32.totalorder %s16, 0
    %p43 = por %p41, %p42
    %s45 = sadd.s32 %s44, 1
    %p48 = scmp.eq.s32.totalorder %s10, 2
    %p49 = scmp.ne.s32.totalorder %s44, %s46
    %p50 = scmp.eq.s32.totalorder %s10, 0
    %p51 = por %p49, %p50
    %p52 = scmp.ne.s32.totalorder %s44, %s46
    %p53 = scmp.eq.s32.totalorder %s15, 2
    %p54 = por %p52, %p53
    %p55 = scmp.ne.s32.totalorder %s46, %s47
    %p56 = scmp.eq.s32.totalorder %s15, 0
    %p57 = por %p55, %p56
    %p58 = scmp.ne.s32.totalorder %s46, %s47
    %p59 = scmp.eq.s32.totalorder %s16, 2
    %p60 = por %p58, %p59
    %p62 = scmp.ne.s32.totalorder %s47, %s61
    %p63 = scmp.eq.s32.totalorder %s16, 0
    %p64 = por %p62, %p63
    %s65 = ssub.s32 %s10, %s17
    %p66 = scmp.eq.s32.totalorder %s65, 0
    %s68 = sadd.s32 %s67, 1
    %s69 = scalar_select %p66, %s67, %s68
    %p72 = pneg %p66
    %p73 = scmp.eq.s32.totalorder %s10, 2
    %p74 = por %p72, %p73
    %p75 = scmp.ne.s32.totalorder %s67, %s70
    %p76 = scmp.eq.s32.totalorder %s10, 0
    %p77 = por %p75, %p76
    %p78 = scmp.ne.s32.totalorder %s67, %s70
    %p79 = scmp.eq.s32.totalorder %s15, 2
    %p80 = por %p78, %p79
    %p81 = scmp.ne.s32.totalorder %s70, %s71
    %p82 = scmp.eq.s32.totalorder %s15, 0
    %p83 = por %p81, %p82
    %p84 = scmp.ne.s32.totalorder %s70, %s71
    %p85 = scmp.eq.s32.totalorder %s16, 2
    %p86 = por %p84, %p85
    %p88 = scmp.ne.s32.totalorder %s71, %s87
    %p89 = scmp.eq.s32.totalorder %s16, 0
    %p90 = por %p88, %p89
    %s91 = ssub.s32 %s10, %s17
    %p92 = scmp.eq.s32.totalorder %s91, 0
    %s94 = sadd.s32 %s93, 1
    %s95 = scalar_select %p92, %s93, %s94
    %p98 = pneg %p92
    %p99 = scmp.eq.s32.totalorder %s10, 2
    %p100 = por %p98, %p99
    %p101 = scmp.ne.s32.totalorder %s93, %s96
    %p102 = scmp.eq.s32.totalorder %s10, 0
    %p103 = por %p101, %p102
    %p104 = scmp.ne.s32.totalorder %s93, %s96
    %p105 = scmp.eq.s32.totalorder %s15, 2
    %p106 = por %p104, %p105
    %p107 = scmp.ne.s32.totalorder %s96, %s97
    %p108 = scmp.eq.s32.totalorder %s15, 0
    %p109 = por %p107, %p108
    %p110 = scmp.ne.s32.totalorder %s96, %s97
    %p111 = scmp.eq.s32.totalorder %s16, 2
    %p112 = por %p110, %p111
    %p114 = scmp.ne.s32.totalorder %s97, %s113
    %p115 = scmp.eq.s32.totalorder %s16, 0
    %p116 = por %p114, %p115
    %p117 = scmp.le.s32.totalorder 1, %s10
    %p118 = scmp.lt.s32.totalorder %s10, 4
    %p119 = pnand %p117, %p118
    %p120 = pneg %p119
    // Predicated region
    $region9: #{unet_innermost_block.4} parent=5 // pred_check
      _
    $region10: #{unet_innermost_block.4} parent=5 // pred_check_branch
      %122 = sbr.rel (%p119) target = $region12
    $region11: #{unet_innermost_block.4} parent=5 // pred_region
      %s123 = ssub.s32 %s10, 1
      // Predicated region
      $region13: #{unet_innermost_block.4} parent=11 // pred_check
        %p124 = pneg %p57
      $region14: #{unet_innermost_block.4} parent=11 // pred_check_branch
        %126 = sbr.rel (%p124) target = $region16
      $region15: #{unet_innermost_block.4} parent=11 // pred_region
        _
      $region16: #{unet_innermost_block.4} parent=11 // pred_fallthru
        _
    $region12: #{unet_innermost_block.4} parent=5 // pred_fallthru
      _
    %p127 = scmp.lt.s32.totalorder %s10, 3
    // Predicated region
    $region17: #{unet_innermost_block.4} parent=5 // pred_check
      %p128 = pneg %p127
    $region18: #{unet_innermost_block.4} parent=5 // pred_check_branch
      %130 = sbr.rel (%p128) target = $region20
    $region19: #{unet_innermost_block.4} parent=5 // pred_region
      // Predicated region
      $region21: #{unet_innermost_block.4} parent=19 // pred_check
        %p131 = pneg %p30
      $region22: #{unet_innermost_block.4} parent=19 // pred_check_branch
        %133 = sbr.rel (%p131) target = $region24
      $region23: #{unet_innermost_block.4} parent=19 // pred_region
        %s134 = smul.u32 6, %s10
        %p135 = scmp.lt.s32.totalorder %s134, 17
        %s136 = scalar_select %p135, %s134, 17
        %s137 = smul.addr %s136, 4
        %s138 = scalar_lea.vmem %s0, %s137
        %s139 = smul.u32 6, %s10
      $region24: #{unet_innermost_block.4} parent=19 // pred_fallthru
        _
    $region20: #{unet_innermost_block.4} parent=5 // pred_fallthru
      _
    %p140 = scmp.le.s32.totalorder 1, %s10
    %p141 = scmp.lt.s32.totalorder %s10, 4
    %p142 = pnand %p140, %p141
    %p143 = pneg %p142
    // Predicated region
    $region25: #{unet_innermost_block.4} parent=5 // pred_check
      _
    $region26: #{unet_innermost_block.4} parent=5 // pred_check_branch
      %145 = sbr.rel (%p142) target = $region28
    $region27: #{unet_innermost_block.4} parent=5 // pred_region
      %s146 = ssub.s32 %s10, 1
      %s147 = smul.u32 6, %s15
      %p148 = scmp.lt.s32.totalorder %s147, 17
      %s149 = scalar_select %p148, %s147, 17
      %s150 = smul.addr %s149, 4
      %s151 = scalar_lea.vmem %s0, %s150
      %p152 = pneg %p36
      %p153 = pneg %p33
      %p154 = pneg %p57
      %p155 = pneg %p54
      %p156 = pneg %p83
      %p157 = pneg %p80
      %s158 = smul.u32 6, %s15
      %p159 = scmp.lt.s32.totalorder %s158, 17
      %s160 = scalar_select %p159, %s158, 17
      %s161 = smul.addr %s160, 8
      %s162 = scalar_lea.vmem %s2, %s161
      %p163 = pneg %p109
      %p164 = pneg %p106
      %p165 = scmp.lt.s32.totalorder %s15, 2
      %s166 = scalar_select %p165, %s15, 2
      %s167 = smul.addr %s166, 2
      %s168 = scalar_lea.vmem %s3, %s167
      %s169 = smul.u32 6, %s15
      %p170 = scmp.lt.s32.totalorder %s169, 17
      %s171 = scalar_select %p170, %s169, 17
      %s172 = smul.addr %s171, 4
      %s173 = scalar_lea.vmem %s0, %s172
      %s174 = smul.u32 6, %s15
      %s175 = smul.u32 6, %s15
      %p176 = scmp.lt.s32.totalorder %s175, 17
      %s177 = scalar_select %p176, %s175, 17
      %s178 = smul.addr %s177, 8
      %s179 = scalar_lea.vmem %s2, %s178
      %s180 = smul.u32 6, %s15
      %p181 = scmp.lt.s32.totalorder %s15, 2
      %s182 = scalar_select %p181, %s15, 2
      %s183 = smul.addr %s182, 2
      %s184 = scalar_lea.vmem %s3, %s183
      %v186 = vld [vmem:[%s173] sm:$0xf]
      %v187 = vld [vmem:[%s173 + $0x4] sm:$0xf]
      %v188 = vld [vmem:[%s173 + $0x8] sm:$0xf]
      %v189 = vld [vmem:[%s173 + $0xc] sm:$0xf]
      %v190 = vld [vmem:[%s173 + $0x10] sm:$0xf]
      %v191 = vld [vmem:[%s173 + $0x14] sm:$0xf]
      %v192 = vld [vmem:[%s1] sm:$0xf]
      %v193 = vld [vmem:[%s1 + $0x4] sm:$0xf]
      %v194 = vld [vmem:[%s1 + $0x8] sm:$0xf]
      %v195 = vld [vmem:[%s1 + $0xc] sm:$0xf]
      %v202 = vunpack.c.l.b16 %v186
      %v203 = vunpack.c.l.b16 %v187
      %v204 = vunpack.c.l.b16 %v188
      %v205 = vunpack.c.l.b16 %v189
      %v206 = vunpack.c.l.b16 %v190
      %v207 = vunpack.c.l.b16 %v191
      %v208 = vpack.c.b16 %v203, %v202
      %v209 = vpack.c.b16 %v205, %v204
      %v210 = vpack.c.b16 %v207, %v206
      %v215 = vunpack.c.l.b16 %v192
      %v216 = vunpack.c.l.b16 %v193
      %v217 = vunpack.c.l.b16 %v194
      %v218 = vunpack.c.l.b16 %v195
      %v219 = vpack.c.b16 %v216, %v215
      %v220 = vpack.c.b16 %v218, %v217
      %vm223 = vcmask 261120
      %v225 = vsel %vm223, %v208, 0
      %v228 = vsel %vm223, %v209, 0
      %v231 = vsel %vm223, %v210, 0
      %233 = vmatprep.subr.bf16.mxu0 0
      %234 = vmatpush1.bf16.msra.mxu0 0
      %235 = vmatprep.subr.bf16.mxu0 0
      %236 = vmatpush1.bf16.msra.mxu0 0
      %237 = vmatprep.subr.bf16.mxu0 0
      %238 = vmatpush1.bf16.msra.mxu0 0
      %239 = vmatprep.subr.bf16.mxu0 0
      %240 = vmatpush1.bf16.msra.mxu0 0
      %241 = vmatprep.subr.bf16.mxu0 0
      %242 = vmatpush1.bf16.msra.mxu0 0
      %243 = vmatprep.subr.bf16.mxu0 0
      %244 = vmatpush1.bf16.msra.mxu0 0
      %245 = vmatprep.subr.bf16.mxu0 0
      %246 = vmatpush1.bf16.msra.mxu0 %v220
      %247 = vmatprep.subr.bf16.mxu0 0
      %248 = vmatpush1.bf16.msra.mxu0 %v219
      %249 = vmatprep.subr.bf16.mxu0 0
      %250 = vmatpush2.bf16.msra.mxu0 0
      %251 = vmatprep.subr.bf16.mxu0 0
      %252 = vmatpush2.bf16.msra.mxu0 0
      %253 = vmatprep.subr.bf16.mxu0 0
      %254 = vmatpush2.bf16.msra.mxu0 0
      %255 = vmatprep.subr.bf16.mxu0 0
      %256 = vmatpush2.bf16.msra.mxu0 0
      %257 = vmatprep.subr.bf16.mxu0 0
      %258 = vmatpush2.bf16.msra.mxu0 0
      %259 = vmatprep.subr.bf16.mxu0 0
      %260 = vmatpush2.bf16.msra.mxu0 0
      %261 = vmatprep.subr.bf16.mxu0 0
      %262 = vmatpush2.bf16.msra.mxu0 0
      %263 = vmatprep.subr.bf16.mxu0 0
      %264 = vmatpush2.bf16.msra.mxu0 0
      %265 = vmatprep.mubr.bf16.mxu0 0
      %266 = vmatmul.mubr.bf16.gmra.mxu0 %v225
      %v267 = vpop.f32.mrf.mxu0
      %v268 = vadd.f32 0.0, %v267
      %v269 = vpop.f32.mrf.mxu0
      %v270 = vpop.f32.mrf.mxu0
      %v271 = vadd.f32 0.0, %v270
      %v272 = vpop.f32.mrf.mxu0
      %273 = vmatprep.mubr.bf16.mxu0 0
      %274 = vmatmul.mubr.bf16.gmra.mxu0 %v228
      %v275 = vpop.f32.mrf.mxu0
      %v276 = vadd.f32 0.0, %v275
      %v277 = vpop.f32.mrf.mxu0
      %v278 = vpop.f32.mrf.mxu0
      %v279 = vadd.f32 0.0, %v278
      %v280 = vpop.f32.mrf.mxu0
      %281 = vmatprep.mubr.bf16.mxu0 0
      %282 = vmatmul.mubr.bf16.gmra.mxu0 %v231
      %v283 = vpop.f32.mrf.mxu0
      %v284 = vadd.f32 0.0, %v283
      %v285 = vpop.f32.mrf.mxu0
      %v286 = vpop.f32.mrf.mxu0
      %v287 = vadd.f32 0.0, %v286
      %v288 = vpop.f32.mrf.mxu0
      %289 = vdwg.mxu0
      %s290 = scalar_lea.vmem %s1, 16
      %v291 = vld [vmem:[%s290] sm:$0xf]
      %v292 = vld [vmem:[%s290 + $0x4] sm:$0xf]
      %v293 = vld [vmem:[%s290 + $0x8] sm:$0xf]
      %v294 = vld [vmem:[%s290 + $0xc] sm:$0xf]
      %295 = vrot.lane.b32.xlu0 %v208, 96
      %v296 = vpop.permute.xlu0 %295
      %297 = vrot.lane.b32.xlu0 %v209, 96
      %v298 = vpop.permute.xlu0 %297
      %299 = vrot.lane.b32.xlu0 %v210, 96
      %v300 = vpop.permute.xlu0 %299
      %v305 = vunpack.c.l.b16 %v291
      %v306 = vunpack.c.l.b16 %v292
      %v307 = vunpack.c.l.b16 %v293
      %v308 = vunpack.c.l.b16 %v294
      %v309 = vpack.c.b16 %v306, %v305
      %v310 = vpack.c.b16 %v308, %v307
      %v314 = vsel %vm223, %v296, 0
      %v317 = vsel %vm223, %v298, 0
      %v320 = vsel %vm223, %v300, 0
      %322 = vmatprep.subr.bf16.mxu0 0
      %323 = vmatpush1.bf16.msra.mxu0 0
      %324 = vmatprep.subr.bf16.mxu0 0
      %325 = vmatpush1.bf16.msra.mxu0 0
      %326 = vmatprep.subr.bf16.mxu0 0
      %327 = vmatpush1.bf16.msra.mxu0 0
      %328 = vmatprep.subr.bf16.mxu0 0
      %329 = vmatpush1.bf16.msra.mxu0 0
      %330 = vmatprep.subr.bf16.mxu0 0
      %331 = vmatpush1.bf16.msra.mxu0 0
      %332 = vmatprep.subr.bf16.mxu0 0
      %333 = vmatpush1.bf16.msra.mxu0 0
      %334 = vmatprep.subr.bf16.mxu0 0
      %335 = vmatpush1.bf16.msra.mxu0 %v310
      %336 = vmatprep.subr.bf16.mxu0 0
      %337 = vmatpush1.bf16.msra.mxu0 %v309
      %338 = vmatprep.subr.bf16.mxu0 0
      %339 = vmatpush2.bf16.msra.mxu0 0
      %340 = vmatprep.subr.bf16.mxu0 0
      %341 = vmatpush2.bf16.msra.mxu0 0
      %342 = vmatprep.subr.bf16.mxu0 0
      %343 = vmatpush2.bf16.msra.mxu0 0
      %344 = vmatprep.subr.bf16.mxu0 0
      %345 = vmatpush2.bf16.msra.mxu0 0
      %346 = vmatprep.subr.bf16.mxu0 0
      %347 = vmatpush2.bf16.msra.mxu0 0
      %348 = vmatprep.subr.bf16.mxu0 0
      %349 = vmatpush2.bf16.msra.mxu0 0
      %350 = vmatprep.subr.bf16.mxu0 0
      %351 = vmatpush2.bf16.msra.mxu0 0
      %352 = vmatprep.subr.bf16.mxu0 0
      %353 = vmatpush2.bf16.msra.mxu0 0
      %354 = vmatprep.mubr.bf16.mxu0 0
      %355 = vmatmul.mubr.bf16.gmra.mxu0 %v314
      %v356 = vpop.f32.mrf.mxu0
      %v357 = vadd.f32 0.0, %v356
      %v358 = vpop.f32.mrf.mxu0
      %v359 = vpop.f32.mrf.mxu0
      %v360 = vadd.f32 0.0, %v359
      %v361 = vpop.f32.mrf.mxu0
      %362 = vmatprep.mubr.bf16.mxu0 0
      %363 = vmatmul.mubr.bf16.gmra.mxu0 %v317
      %v364 = vpop.f32.mrf.mxu0
      %v365 = vadd.f32 0.0, %v364
      %v366 = vpop.f32.mrf.mxu0
      %v367 = vpop.f32.mrf.mxu0
      %v368 = vadd.f32 0.0, %v367
      %v369 = vpop.f32.mrf.mxu0
      %370 = vmatprep.mubr.bf16.mxu0 0
      %371 = vmatmul.mubr.bf16.gmra.mxu0 %v320
      %v372 = vpop.f32.mrf.mxu0
      %v373 = vadd.f32 0.0, %v372
      %v374 = vpop.f32.mrf.mxu0
      %v375 = vpop.f32.mrf.mxu0
      %v376 = vadd.f32 0.0, %v375
      %v377 = vpop.f32.mrf.mxu0
      %378 = vdwg.mxu0
      %s379 = scalar_lea.vmem %s1, 32
      %v380 = vld [vmem:[%s379] sm:$0xf]
      %v381 = vld [vmem:[%s379 + $0x4] sm:$0xf]
      %v382 = vld [vmem:[%s379 + $0x8] sm:$0xf]
      %v383 = vld [vmem:[%s379 + $0xc] sm:$0xf]
      %384 = vrot.lane.b32.xlu0 %v208, 64
      %v385 = vpop.permute.xlu0 %384
      %386 = vrot.lane.b32.xlu0 %v209, 64
      %v387 = vpop.permute.xlu0 %386
      %388 = vrot.lane.b32.xlu0 %v210, 64
      %v389 = vpop.permute.xlu0 %388
      %v394 = vunpack.c.l.b16 %v380
      %v395 = vunpack.c.l.b16 %v381
      %v396 = vunpack.c.l.b16 %v382
      %v397 = vunpack.c.l.b16 %v383
      %v398 = vpack.c.b16 %v395, %v394
      %v399 = vpack.c.b16 %v397, %v396
      %v403 = vsel %vm223, %v385, 0
      %v406 = vsel %vm223, %v387, 0
      %v409 = vsel %vm223, %v389, 0
      %411 = vmatprep.subr.bf16.mxu0 0
      %412 = vmatpush1.bf16.msra.mxu0 0
      %413 = vmatprep.subr.bf16.mxu0 0
      %414 = vmatpush1.bf16.msra.mxu0 0
      %415 = vmatprep.subr.bf16.mxu0 0
      %416 = vmatpush1.bf16.msra.mxu0 0
      %417 = vmatprep.subr.bf16.mxu0 0
      %418 = vmatpush1.bf16.msra.mxu0 0
      %419 = vmatprep.subr.bf16.mxu0 0
      %420 = vmatpush1.bf16.msra.mxu0 0
      %421 = vmatprep.subr.bf16.mxu0 0
      %422 = vmatpush1.bf16.msra.mxu0 0
      %423 = vmatprep.subr.bf16.mxu0 0
      %424 = vmatpush1.bf16.msra.mxu0 %v399
      %425 = vmatprep.subr.bf16.mxu0 0
      %426 = vmatpush1.bf16.msra.mxu0 %v398
      %427 = vmatprep.subr.bf16.mxu0 0
      %428 = vmatpush2.bf16.msra.mxu0 0
      %429 = vmatprep.subr.bf16.mxu0 0
      %430 = vmatpush2.bf16.msra.mxu0 0
      %431 = vmatprep.subr.bf16.mxu0 0
      %432 = vmatpush2.bf16.msra.mxu0 0
      %433 = vmatprep.subr.bf16.mxu0 0
      %434 = vmatpush2.bf16.msra.mxu0 0
      %435 = vmatprep.subr.bf16.mxu0 0
      %436 = vmatpush2.bf16.msra.mxu0 0
      %437 = vmatprep.subr.bf16.mxu0 0
      %438 = vmatpush2.bf16.msra.mxu0 0
      %439 = vmatprep.subr.bf16.mxu0 0
      %440 = vmatpush2.bf16.msra.mxu0 0
      %441 = vmatprep.subr.bf16.mxu0 0
      %442 = vmatpush2.bf16.msra.mxu0 0
      %443 = vmatprep.mubr.bf16.mxu0 0
      %444 = vmatmul.mubr.bf16.gmra.mxu0 %v403
      %v445 = vpop.f32.mrf.mxu0
      %v446 = vadd.f32 0.0, %v445
      %v447 = vpop.f32.mrf.mxu0
      %v448 = vpop.f32.mrf.mxu0
      %v449 = vadd.f32 0.0, %v448
      %v450 = vpop.f32.mrf.mxu0
      %451 = vmatprep.mubr.bf16.mxu0 0
      %452 = vmatmul.mubr.bf16.gmra.mxu0 %v406
      %v453 = vpop.f32.mrf.mxu0
      %v454 = vadd.f32 0.0, %v453
      %v455 = vpop.f32.mrf.mxu0
      %v456 = vpop.f32.mrf.mxu0
      %v457 = vadd.f32 0.0, %v456
      %v458 = vpop.f32.mrf.mxu0
      %459 = vmatprep.mubr.bf16.mxu0 0
      %460 = vmatmul.mubr.bf16.gmra.mxu0 %v409
      %v461 = vpop.f32.mrf.mxu0
      %v462 = vadd.f32 0.0, %v461
      %v463 = vpop.f32.mrf.mxu0
      %v464 = vpop.f32.mrf.mxu0
      %v465 = vadd.f32 0.0, %v464
      %v466 = vpop.f32.mrf.mxu0
      %467 = vdwg.mxu0
      %s468 = scalar_lea.vmem %s1, 48
      %v469 = vld [vmem:[%s468] sm:$0xf]
      %v470 = vld [vmem:[%s468 + $0x4] sm:$0xf]
      %v471 = vld [vmem:[%s468 + $0x8] sm:$0xf]
      %v472 = vld [vmem:[%s468 + $0xc] sm:$0xf]
      %473 = vrot.lane.b32.xlu0 %v208, 32
      %v474 = vpop.permute.xlu0 %473
      %475 = vrot.lane.b32.xlu0 %v209, 32
      %v476 = vpop.permute.xlu0 %475
      %477 = vrot.lane.b32.xlu0 %v210, 32
      %v478 = vpop.permute.xlu0 %477
      %v483 = vunpack.c.l.b16 %v469
      %v484 = vunpack.c.l.b16 %v470
      %v485 = vunpack.c.l.b16 %v471
      %v486 = vunpack.c.l.b16 %v472
      %v487 = vpack.c.b16 %v484, %v483
      %v488 = vpack.c.b16 %v486, %v485
      %v492 = vsel %vm223, %v474, 0
      %v495 = vsel %vm223, %v476, 0
      %v498 = vsel %vm223, %v478, 0
      %500 = vmatprep.subr.bf16.mxu0 0
      %501 = vmatpush1.bf16.msra.mxu0 0
      %502 = vmatprep.subr.bf16.mxu0 0
      %503 = vmatpush1.bf16.msra.mxu0 0
      %504 = vmatprep.subr.bf16.mxu0 0
      %505 = vmatpush1.bf16.msra.mxu0 0
      %506 = vmatprep.subr.bf16.mxu0 0
      %507 = vmatpush1.bf16.msra.mxu0 0
      %508 = vmatprep.subr.bf16.mxu0 0
      %509 = vmatpush1.bf16.msra.mxu0 0
      %510 = vmatprep.subr.bf16.mxu0 0
      %511 = vmatpush1.bf16.msra.mxu0 0
      %512 = vmatprep.subr.bf16.mxu0 0
      %513 = vmatpush1.bf16.msra.mxu0 %v488
      %514 = vmatprep.subr.bf16.mxu0 0
      %515 = vmatpush1.bf16.msra.mxu0 %v487
      %516 = vmatprep.subr.bf16.mxu0 0
      %517 = vmatpush2.bf16.msra.mxu0 0
      %518 = vmatprep.subr.bf16.mxu0 0
      %519 = vmatpush2.bf16.msra.mxu0 0
      %520 = vmatprep.subr.bf16.mxu0 0
      %521 = vmatpush2.bf16.msra.mxu0 0
      %522 = vmatprep.subr.bf16.mxu0 0
      %523 = vmatpush2.bf16.msra.mxu0 0
      %524 = vmatprep.subr.bf16.mxu0 0
      %525 = vmatpush2.bf16.msra.mxu0 0
      %526 = vmatprep.subr.bf16.mxu0 0
      %527 = vmatpush2.bf16.msra.mxu0 0
      %528 = vmatprep.subr.bf16.mxu0 0
      %529 = vmatpush2.bf16.msra.mxu0 0
      %530 = vmatprep.subr.bf16.mxu0 0
      %531 = vmatpush2.bf16.msra.mxu0 0
      %532 = vmatprep.mubr.bf16.mxu0 0
      %533 = vmatmul.mubr.bf16.gmra.mxu0 %v492
      %v534 = vpop.f32.mrf.mxu0
      %v535 = vadd.f32 0.0, %v534
      %v536 = vpop.f32.mrf.mxu0
      %v537 = vpop.f32.mrf.mxu0
      %v538 = vadd.f32 0.0, %v537
      %v539 = vpop.f32.mrf.mxu0
      %540 = vmatprep.mubr.bf16.mxu0 0
      %541 = vmatmul.mubr.bf16.gmra.mxu0 %v495
      %v542 = vpop.f32.mrf.mxu0
      %v543 = vadd.f32 0.0, %v542
      %v544 = vpop.f32.mrf.mxu0
      %v545 = vpop.f32.mrf.mxu0
      %v546 = vadd.f32 0.0, %v545
      %v547 = vpop.f32.mrf.mxu0
      %548 = vmatprep.mubr.bf16.mxu0 0
      %549 = vmatmul.mubr.bf16.gmra.mxu0 %v498
      %v550 = vpop.f32.mrf.mxu0
      %v551 = vadd.f32 0.0, %v550
      %v552 = vpop.f32.mrf.mxu0
      %v553 = vpop.f32.mrf.mxu0
      %v554 = vadd.f32 0.0, %v553
      %v555 = vpop.f32.mrf.mxu0
      %556 = vdwg.mxu0
      %563 = vrot.lane.b32.xlu0 %v357, 4
      %v564 = vpop.permute.xlu0 %563
      %565 = vrot.lane.b32.xlu0 %v360, 4
      %v566 = vpop.permute.xlu0 %565
      %567 = vrot.lane.b32.xlu0 %v365, 4
      %v568 = vpop.permute.xlu0 %567
      %569 = vrot.lane.b32.xlu0 %v368, 4
      %v570 = vpop.permute.xlu0 %569
      %571 = vrot.lane.b32.xlu0 %v373, 4
      %v572 = vpop.permute.xlu0 %571
      %573 = vrot.lane.b32.xlu0 %v376, 4
      %v574 = vpop.permute.xlu0 %573
      %587 = vrot.lane.b32.xlu0 %v446, 8
      %v588 = vpop.permute.xlu0 %587
      %589 = vrot.lane.b32.xlu0 %v449, 8
      %v590 = vpop.permute.xlu0 %589
      %591 = vrot.lane.b32.xlu0 %v454, 8
      %v592 = vpop.permute.xlu0 %591
      %593 = vrot.lane.b32.xlu0 %v457, 8
      %v594 = vpop.permute.xlu0 %593
      %595 = vrot.lane.b32.xlu0 %v462, 8
      %v596 = vpop.permute.xlu0 %595
      %597 = vrot.lane.b32.xlu0 %v465, 8
      %v598 = vpop.permute.xlu0 %597
      %611 = vrot.lane.b32.xlu0 %v535, 12
      %v612 = vpop.permute.xlu0 %611
      %613 = vrot.lane.b32.xlu0 %v538, 12
      %v614 = vpop.permute.xlu0 %613
      %615 = vrot.lane.b32.xlu0 %v543, 12
      %v616 = vpop.permute.xlu0 %615
      %617 = vrot.lane.b32.xlu0 %v546, 12
      %v618 = vpop.permute.xlu0 %617
      %619 = vrot.lane.b32.xlu0 %v551, 12
      %v620 = vpop.permute.xlu0 %619
      %621 = vrot.lane.b32.xlu0 %v554, 12
      %v622 = vpop.permute.xlu0 %621
      %vm629 = vcmask 31744
      %v630 = vsel %vm629, %v268, %v564
      %v631 = vsel %vm629, %v271, %v566
      %v632 = vsel %vm629, %v276, %v568
      %v633 = vsel %vm629, %v279, %v570
      %v634 = vsel %vm629, %v284, %v572
      %v635 = vsel %vm629, %v287, %v574
      %vm636 = vcmask 64512
      %v637 = vsel %vm636, %v630, %v588
      %v638 = vsel %vm636, %v631, %v590
      %v639 = vsel %vm636, %v632, %v592
      %v640 = vsel %vm636, %v633, %v594
      %v641 = vsel %vm636, %v634, %v596
      %v642 = vsel %vm636, %v635, %v598
      %vm643 = vcmask 97280
      %v644 = vsel %vm643, %v637, %v612
      %v645 = vsel %vm643, %v638, %v614
      %v646 = vsel %vm643, %v639, %v616
      %v647 = vsel %vm643, %v640, %v618
      %v648 = vsel %vm643, %v641, %v620
      %v649 = vsel %vm643, %v642, %v622
      %vm650 = vcmask 130048
      %651 = vst.msk [vmem:[%s179] sm:$0xff] %vm650, %v644
      %652 = vst.msk [vmem:[%s179 + $0x8] sm:$0xff] %vm650, %v645
      %653 = vst.msk [vmem:[%s179 + $0x10] sm:$0xff] %vm650, %v646
      %654 = vst.msk [vmem:[%s179 + $0x18] sm:$0xff] %vm650, %v647
      %655 = vst.msk [vmem:[%s179 + $0x20] sm:$0xff] %vm650, %v648
      %656 = vst.msk [vmem:[%s179 + $0x28] sm:$0xff] %vm650, %v649
      %v657 = vsel %vm650, %v644, 0.0
      %v658 = vsel %vm650, %v645, 0.0
      %v659 = vadd.f32 %v657, %v658
      %v660 = vsel %vm650, %v646, 0.0
      %v661 = vadd.f32 %v659, %v660
      %v662 = vsel %vm650, %v647, 0.0
      %v663 = vadd.f32 %v661, %v662
      %v664 = vsel %vm650, %v648, 0.0
      %v665 = vadd.f32 %v663, %v664
      %v666 = vsel %vm650, %v649, 0.0
      %v667 = vadd.f32 %v665, %v666
      %v668 = vrot.slane %v667, 4
      %v669 = vadd.f32 %v667, %v668
      %v670 = vrot.slane %v669, 2
      %v671 = vadd.f32 %v669, %v670
      %v672 = vrot.slane %v671, 1
      %v673 = vadd.f32 %v671, %v672
      %v674 = vmul.f32 %v644, %v644
      %v675 = vmul.f32 %v645, %v645
      %v676 = vmul.f32 %v646, %v646
      %v677 = vmul.f32 %v647, %v647
      %v678 = vmul.f32 %v648, %v648
      %v679 = vmul.f32 %v649, %v649
      %v680 = vsel %vm650, %v674, 0.0
      %v681 = vsel %vm650, %v675, 0.0
      %v682 = vadd.f32 %v680, %v681
      %v683 = vsel %vm650, %v676, 0.0
      %v684 = vadd.f32 %v682, %v683
      %v685 = vsel %vm650, %v677, 0.0
      %v686 = vadd.f32 %v684, %v685
      %v687 = vsel %vm650, %v678, 0.0
      %v688 = vadd.f32 %v686, %v687
      %v689 = vsel %vm650, %v679, 0.0
      %v690 = vadd.f32 %v688, %v689
      %v691 = vrot.slane %v690, 4
      %v692 = vadd.f32 %v690, %v691
      %v693 = vrot.slane %v692, 2
      %v694 = vadd.f32 %v692, %v693
      %v695 = vrot.slane %v694, 1
      %v696 = vadd.f32 %v694, %v695
      %vm697 = vcmask 1040384
      %v698 = vsel %vm697, %v673, %v696
      %vm699 = vcmask 123904
      %700 = vst.msk [vmem:[%s184] sm:$0x3] %vm699, %v698
      %s701 = smul.u32 6, %s15
      %p702 = scmp.lt.s32.totalorder %s701, 17
      %s703 = scalar_select %p702, %s701, 17
      %s704 = smul.addr %s703, 8
      %s705 = scalar_lea.vmem %s2, %s704
      %p706 = scmp.lt.s32.totalorder %s15, 2
      %s707 = scalar_select %p706, %s15, 2
      %s708 = smul.addr %s707, 2
      %s709 = scalar_lea.vmem %s3, %s708
      // Predicated region
      $region29: #{unet_innermost_block.4} parent=27 // pred_check
        %p710 = pneg %p80
      $region30: #{unet_innermost_block.4} parent=27 // pred_check_branch
        %712 = sbr.rel (%p710) target = $region32
      $region31: #{unet_innermost_block.4} parent=27 // pred_region
        %s713 = smul.u32 6, %s15
      $region32: #{unet_innermost_block.4} parent=27 // pred_fallthru
        _
      // Predicated region
      $region33: #{unet_innermost_block.4} parent=27 // pred_check
        %p714 = pneg %p106
      $region34: #{unet_innermost_block.4} parent=27 // pred_check_branch
        %716 = sbr.rel (%p714) target = $region36
      $region35: #{unet_innermost_block.4} parent=27 // pred_region
        _
      $region36: #{unet_innermost_block.4} parent=27 // pred_fallthru
        _
    $region28: #{unet_innermost_block.4} parent=5 // pred_fallthru
      _
    %p717 = scmp.le.s32.totalorder 2, %s10
    // Predicated region
    $region37: #{unet_innermost_block.4} parent=5 // pred_check
      %p718 = pneg %p717
    $region38: #{unet_innermost_block.4} parent=5 // pred_check_branch
      %720 = sbr.rel (%p718) target = $region40
    $region39: #{unet_innermost_block.4} parent=5 // pred_region
      %s721 = ssub.s32 %s10, 2
      // Predicated region
      $region41: #{unet_innermost_block.4} parent=39 // pred_check
        %p722 = pneg %p86
      $region42: #{unet_innermost_block.4} parent=39 // pred_check_branch
        %724 = sbr.rel (%p722) target = $region44
      $region43: #{unet_innermost_block.4} parent=39 // pred_region
        %s725 = smul.u32 6, %s16
        %p726 = scmp.lt.s32.totalorder %s725, 17
        %s727 = scalar_select %p726, %s725, 17
        %s728 = smul.addr %s727, 8
        %s729 = scalar_lea.vmem %s2, %s728
      $region44: #{unet_innermost_block.4} parent=39 // pred_fallthru
        _
      // Predicated region
      $region45: #{unet_innermost_block.4} parent=39 // pred_check
        %p730 = pneg %p112
      $region46: #{unet_innermost_block.4} parent=39 // pred_check_branch
        %732 = sbr.rel (%p730) target = $region48
      $region47: #{unet_innermost_block.4} parent=39 // pred_region
        %p733 = scmp.lt.s32.totalorder %s16, 2
        %s734 = scalar_select %p733, %s16, 2
        %s735 = smul.addr %s734, 2
        %s736 = scalar_lea.vmem %s3, %s735
      $region48: #{unet_innermost_block.4} parent=39 // pred_fallthru
        _
    $region40: #{unet_innermost_block.4} parent=5 // pred_fallthru
      _
  $region6: #{unet_innermost_block.4} parent=0 // loop_footer
    %s14 = sadd.s32 1, %s10
  $region7: #{unet_innermost_block.4} parent=0 // loop_footer_branch
    %9 = sbr.rel target = $region3
  $region8: #{unet_innermost_block.4} parent=0 // loop_exit
    _

// kernel: unet_innermost_block.5
$region0: #{unet_innermost_block.5}
  #allocation0 [shape = 'u32[]', space=smem, size = 0x4, offset = 0x4, fixed_abs, tag = 'smem constant byte address 0x4 - core index']
  #allocation1 [shape = 'u32[144,128]{1,0:T(1,128)}', space=vmem, size = 0x12000, scoped, tag = 'internal scratch']
  %s0 = inlined_call_operand.vmem [shape: f32[16,128], index: 0, kind: input, shape index: {}]
  %s1 = inlined_call_operand.vmem [shape: f32[1,128], index: 1, kind: input, shape index: {}]
  %s2 = inlined_call_operand.vmem [shape: f32[1,128], index: 2, kind: input, shape index: {}]
  %s3 = inlined_call_operand.vmem [shape: f32[16,128], index: 3, kind: output, shape index: {}]
  %s4 = sld [smem:[#allocation0]]
  $region22: #{unet_innermost_block.5} parent=0
    _
  %s6 = ssub.s32 1, %s4
  %s7 = scalar_select 0, %s6, %s4
  // Predicated region
  $region2: #{unet_innermost_block.5} parent=0 // pred_check
    _
  $region3: #{unet_innermost_block.5} parent=0 // pred_check_branch
    %9 = sbr.rel (0) target = $region5
  $region4: #{unet_innermost_block.5} parent=0 // pred_region
    _
  $region5: #{unet_innermost_block.5} parent=0 // pred_fallthru
    _
  // Predicated region
  $region6: #{unet_innermost_block.5} parent=0 // pred_check
    _
  $region7: #{unet_innermost_block.5} parent=0 // pred_check_branch
    %11 = sbr.rel (0) target = $region9
  $region8: #{unet_innermost_block.5} parent=0 // pred_region
    _
  $region9: #{unet_innermost_block.5} parent=0 // pred_fallthru
    _
  // Predicated region
  $region10: #{unet_innermost_block.5} parent=0 // pred_check
    _
  $region11: #{unet_innermost_block.5} parent=0 // pred_check_branch
    %13 = sbr.rel (0) target = $region13
  $region12: #{unet_innermost_block.5} parent=0 // pred_region
    _
  $region13: #{unet_innermost_block.5} parent=0 // pred_fallthru
    _
  %v14 = vld [vmem:[%s0] sm:$0xff]
  %v15 = vld [vmem:[%s0 + $0x8] sm:$0xff]
  %v16 = vld [vmem:[%s1] sm:$0x1]
  %v18 = vlaneseq
  %v19 = vshrl.u32 %v18, 7
  %v20 = vsub.s32 0, %v19
  %v21 = vrot.slane %v16, %v20
  %v23 = vmul.f32 %v14, %v21
  %v24 = vmul.f32 %v15, %v21
  %v25 = vld [vmem:[%s2] sm:$0x1]
  %v27 = vlaneseq
  %v28 = vshrl.u32 %v27, 7
  %v29 = vsub.s32 0, %v28
  %v30 = vrot.slane %v25, %v29
  %v32 = vadd.f32 %v23, %v30
  %v33 = vadd.f32 %v24, %v30
  %34 = vst [vmem:[%s3] sm:$0xff] %v32
  %35 = vst [vmem:[%s3 + $0x8] sm:$0xff] %v33
  // Predicated region
  $region14: #{unet_innermost_block.5} parent=0 // pred_check
    _
  $region15: #{unet_innermost_block.5} parent=0 // pred_check_branch
    %37 = sbr.rel (0) target = $region17
  $region16: #{unet_innermost_block.5} parent=0 // pred_region
    _
  $region17: #{unet_innermost_block.5} parent=0 // pred_fallthru
    _
  // Predicated region
  $region18: #{unet_innermost_block.5} parent=0 // pred_check
    _
  $region19: #{unet_innermost_block.5} parent=0 // pred_check_branch
    %39 = sbr.rel (0) target = $region21
  $region20: #{unet_innermost_block.5} parent=0 // pred_region
    _
  $region21: #{unet_innermost_block.5} parent=0 // pred_fallthru
    _

</llo_original>
